<compile_context>
chip_gen: v7x
topology: tpu7x:2x2x1
jax: 0.10.0
libtpu: 0.0.40
codegen_flags: <defaults>
</compile_context>

<pallas_src>
import functools

import jax
import jax.numpy as jnp
from jax.experimental import pallas as pl
from jax.experimental.pallas import tpu as pltpu

LN_EPS = 1e-5       # PyTorch nn.LayerNorm default
NEG_BIG = -1e30     # finite mask value (safe if later moved to bf16 scores)


def _layernorm(v, gamma, beta):
    mu = jnp.mean(v, axis=-1, keepdims=True)
    var = jnp.mean((v - mu) ** 2, axis=-1, keepdims=True)
    return (v - mu) * jax.lax.rsqrt(var + LN_EPS) * gamma + beta


def block_kernel(x_ref,
                 wqkv_ref,                    # (D, 3D) = [Wq | Wk | Wv] fused
                 wo_ref, bo_ref,              # attention output projection
                 w1_ref, b1_ref,              # FFN first linear  (D, 4D)
                 w2_ref, b2_ref,              # FFN second linear (4D, D)
                 g1_ref, be1_ref,             # LayerNorm 1
                 g2_ref, be2_ref,             # LayerNorm 2
                 o_ref,
                 qh_ref, kh_ref, vh_ref,      # (H, T, hs) scratch slabs
                 sa_ref,                      # (T, D) merged-heads scratch slab
                 *, num_heads, head_size, ff_chunk, compute_dtype):
    f32 = jnp.float32
    cd = compute_dtype

    def mm(a, b):
        # MXU matmul; bf16 operands when compute_dtype=bf16, always f32 accumulate.
        return jnp.dot(a.astype(cd), b.astype(cd), preferred_element_type=f32)

    x = x_ref[0]                              # (T, D) float32
    T, D = x.shape

    # ---- ln1 + fused QKV projection (single MXU pass) -----------------------
    h1 = _layernorm(x, g1_ref[0], be1_ref[0])
    qkv = mm(h1, wqkv_ref[...])               # (T, 3D)

    # NOTE: reference scales by C**-0.5 with C = n_embd (full embedding dim),
    # not head_size -- reproduce exactly. Folded once into q.
    scale = jnp.float32(D) ** -0.5

    # split heads into (H, T, hs) slabs (static lane slices, no reshape/concat)
    for hd in range(num_heads):
        lo = hd * head_size
        hi = lo + head_size
        qh_ref[hd] = qkv[:, lo:hi] * scale
        kh_ref[hd] = qkv[:, D + lo:D + hi]
        vh_ref[hd] = qkv[:, 2 * D + lo:2 * D + hi]

    qh = qh_ref[...]                          # (H, T, hs)
    kh = kh_ref[...]
    vh = vh_ref[...]

    # causal mask (tril)
    row = jax.lax.broadcasted_iota(jnp.int32, (T, T), 0)
    col = jax.lax.broadcasted_iota(jnp.int32, (T, T), 1)
    causal = (col <= row)[None]               # (1, T, T)

    # one batched contraction over all heads (leading batch dim -> single MXU stream)
    s = jnp.einsum('htd,hsd->hts', qh.astype(cd), kh.astype(cd),
                   preferred_element_type=f32)           # (H, T, T)
    s = jnp.where(causal, s, NEG_BIG)

    # explicit softmax; reciprocal goes to the EUP slot
    m = jnp.max(s, axis=-1, keepdims=True)
    p = jnp.exp(s - m)
    l = jnp.sum(p, axis=-1, keepdims=True)
    p = p * pl.reciprocal(l, approx=True)

    ctx = jnp.einsum('hts,hsd->htd', p.astype(cd), vh.astype(cd),
                     preferred_element_type=f32)         # (H, T, hs)

    # merge heads into a (T, D) slab (no lane-axis concatenate)
    for hd in range(num_heads):
        lo = hd * head_size
        sa_ref[:, lo:lo + head_size] = ctx[hd]

    sa = mm(sa_ref[...], wo_ref[...]) + bo_ref[0]
    x1 = x + sa                                           # residual 1

    # ---- ln2 + feed-forward (chunked over the 4D hidden dim) ----------------
    h2 = _layernorm(x1, g2_ref[0], be2_ref[0])
    hidden = w1_ref.shape[1]
    acc = jnp.zeros((T, D), f32)
    for lo in range(0, hidden, ff_chunk):
        hi = min(lo + ff_chunk, hidden)
        a = mm(h2, w1_ref[:, lo:hi]) + b1_ref[0, lo:hi]
        a = jnp.maximum(a, 0.0)                           # ReLU
        acc = acc + mm(a, w2_ref[lo:hi, :])
    o_ref[0] = x1 + acc + b2_ref[0]                       # residual 2


def transformer_block(x, params, *, num_heads, compute_dtype=jnp.float32):
    B, T, D = x.shape
    assert D % num_heads == 0
    head_size = D // num_heads
    hidden = 4 * D
    ff_chunk = min(hidden, 512)               # bounds the (T, chunk) FFN intermediate

    # fuse Q/K/V weights into one (D, 3D) operand (wrapper-side, XLA handles it)
    wqkv = jnp.concatenate([params["wq"], params["wk"], params["wv"]], axis=1)

    def wspec(shape):
        # weights/biases: constant across the grid -> single pipeline buffer
        return pl.BlockSpec(shape, lambda b: (0,) * len(shape),
                            pipeline_mode=pl.Buffered(1))

    kernel = functools.partial(block_kernel,
                               num_heads=num_heads, head_size=head_size,
                               ff_chunk=ff_chunk, compute_dtype=compute_dtype)

    return pl.pallas_call(
        kernel,
        out_shape=jax.ShapeDtypeStruct((B, T, D), jnp.float32),
        grid_spec=pltpu.PrefetchScalarGridSpec(
            num_scalar_prefetch=0,
            grid=(B,),
            in_specs=[
                pl.BlockSpec((1, T, D), lambda b: (b, 0, 0)),   # x
                wspec((D, 3 * D)),                              # wqkv
                wspec((D, D)),                                  # wo
                wspec((1, D)),                                  # bo
                wspec((D, hidden)),                             # w1
                wspec((1, hidden)),                             # b1
                wspec((hidden, D)),                             # w2
                wspec((1, D)),                                  # b2
                wspec((1, D)),                                  # ln1 gamma
                wspec((1, D)),                                  # ln1 beta
                wspec((1, D)),                                  # ln2 gamma
                wspec((1, D)),                                  # ln2 beta
            ],
            out_specs=pl.BlockSpec((1, T, D), lambda b: (b, 0, 0)),
            scratch_shapes=[
                pltpu.VMEM((num_heads, T, head_size), jnp.float32),  # q heads
                pltpu.VMEM((num_heads, T, head_size), jnp.float32),  # k heads
                pltpu.VMEM((num_heads, T, head_size), jnp.float32),  # v heads
                pltpu.VMEM((T, D), jnp.float32),                     # merged heads
            ]),
        compiler_params=pltpu.CompilerParams(
            dimension_semantics=("parallel",),
            # raise scoped VMEM above 16/32 MiB defaults (still within v7x's 64 MiB)
            vmem_limit_bytes=64 * 1024 * 1024),
    )(x, wqkv,
      params["wo"], params["bo"],
      params["w1"], params["b1"], params["w2"], params["b2"],
      params["g1"], params["be1"], params["g2"], params["be2"])


# ---------------- pure-JAX reference (for verification) -----------------------
def reference_block(x, p, *, num_heads):
    B, T, D = x.shape
    hs = D // num_heads

    def ln(v, g, b):
        mu = jnp.mean(v, -1, keepdims=True)
        var = jnp.mean((v - mu) ** 2, -1, keepdims=True)
        return (v - mu) * jax.lax.rsqrt(var + LN_EPS) * g + b

    h = ln(x, p["g1"][0], p["be1"][0])
    q = h @ p["wq"]
    k = h @ p["wk"]
    v = h @ p["wv"]
    mask = jnp.tril(jnp.ones((T, T), bool))
    scale = D ** -0.5
    outs = []
    for hd in range(num_heads):
        qh, kh, vh = (a[..., hd * hs:(hd + 1) * hs] for a in (q, k, v))
        wei = jnp.einsum("btd,bsd->bts", qh, kh) * scale
        wei = jnp.where(mask, wei, -jnp.inf)
        wei = jax.nn.softmax(wei, -1)
        outs.append(jnp.einsum("bts,bsd->btd", wei, vh))
    sa = jnp.concatenate(outs, -1) @ p["wo"] + p["bo"][0]
    x1 = x + sa
    h2 = ln(x1, p["g2"][0], p["be2"][0])
    ff = jnp.maximum(h2 @ p["w1"] + p["b1"][0], 0.0) @ p["w2"] + p["b2"][0]
    return x1 + ff


if __name__ == "__main__":
    # small shapes consistent with the module's forward (n_embd scaled down)
    B, T, D, H = 2, 8, 32, 4

    key = jax.random.PRNGKey(0)
    ks = jax.random.split(key, 16)
    s = 0.02
    params = {
        "wq": s * jax.random.normal(ks[0], (D, D), jnp.float32),
        "wk": s * jax.random.normal(ks[1], (D, D), jnp.float32),
        "wv": s * jax.random.normal(ks[2], (D, D), jnp.float32),
        "wo": s * jax.random.normal(ks[3], (D, D), jnp.float32),
        "bo": s * jax.random.normal(ks[4], (1, D), jnp.float32),
        "w1": s * jax.random.normal(ks[5], (D, 4 * D), jnp.float32),
        "b1": s * jax.random.normal(ks[6], (1, 4 * D), jnp.float32),
        "w2": s * jax.random.normal(ks[7], (4 * D, D), jnp.float32),
        "b2": s * jax.random.normal(ks[8], (1, D), jnp.float32),
        "g1": jnp.ones((1, D), jnp.float32),
        "be1": jnp.zeros((1, D), jnp.float32),
        "g2": jnp.ones((1, D), jnp.float32),
        "be2": jnp.zeros((1, D), jnp.float32),
    }
    x = jax.random.normal(ks[9], (B, T, D), jnp.float32)

    out = transformer_block(x, params, num_heads=H)   # f32 operands for exact check
    out = jax.block_until_ready(out)

    ref = reference_block(x, params, num_heads=H)
    assert out.shape == (B, T, D)
    # slightly looser than pure-f32 tolerance: softmax uses the EUP approximate
    # reciprocal (pl.reciprocal(..., approx=True)).
    assert jnp.allclose(out, ref, atol=1e-3, rtol=1e-3), (
        float(jnp.max(jnp.abs(out - ref))))

    print("KERNEL_OK")
</pallas_src>

<mosaic_0001>
module attributes {stable_mosaic.version = 11 : i64} {
  func.func @block_kernel(%arg0: i32, %arg1: memref<1x8x32xf32, #tpu.memory_space<vmem>>, %arg2: memref<32x96xf32, #tpu.memory_space<vmem>>, %arg3: memref<32x32xf32, #tpu.memory_space<vmem>>, %arg4: memref<1x32xf32, #tpu.memory_space<vmem>>, %arg5: memref<32x128xf32, #tpu.memory_space<vmem>>, %arg6: memref<1x128xf32, #tpu.memory_space<vmem>>, %arg7: memref<128x32xf32, #tpu.memory_space<vmem>>, %arg8: memref<1x32xf32, #tpu.memory_space<vmem>>, %arg9: memref<1x32xf32, #tpu.memory_space<vmem>>, %arg10: memref<1x32xf32, #tpu.memory_space<vmem>>, %arg11: memref<1x32xf32, #tpu.memory_space<vmem>>, %arg12: memref<1x32xf32, #tpu.memory_space<vmem>>, %arg13: memref<1x8x32xf32, #tpu.memory_space<vmem>>, %arg14: memref<4x8x8xf32, #tpu.memory_space<vmem>>, %arg15: memref<4x8x8xf32, #tpu.memory_space<vmem>>, %arg16: memref<4x8x8xf32, #tpu.memory_space<vmem>>, %arg17: memref<8x32xf32, #tpu.memory_space<vmem>>) attributes {dimension_semantics = [#tpu.dimension_semantics<parallel>], iteration_bounds = array<i64: 2>, scalar_prefetch = 0 : i64, scratch_operands = 4 : i64, tpu.core_type = #tpu.core_type<tc>, window_params = [{transform_indices = @transform_0, window_bounds = array<i64: 1, 8, 32>}, {pipeline_mode = #tpu.pipeline_mode<synchronous>, transform_indices = @transform_1, window_bounds = array<i64: 32, 96>}, {pipeline_mode = #tpu.pipeline_mode<synchronous>, transform_indices = @transform_2, window_bounds = array<i64: 32, 32>}, {pipeline_mode = #tpu.pipeline_mode<synchronous>, transform_indices = @transform_3, window_bounds = array<i64: 1, 32>}, {pipeline_mode = #tpu.pipeline_mode<synchronous>, transform_indices = @transform_4, window_bounds = array<i64: 32, 128>}, {pipeline_mode = #tpu.pipeline_mode<synchronous>, transform_indices = @transform_5, window_bounds = array<i64: 1, 128>}, {pipeline_mode = #tpu.pipeline_mode<synchronous>, transform_indices = @transform_6, window_bounds = array<i64: 128, 32>}, {pipeline_mode = #tpu.pipeline_mode<synchronous>, transform_indices = @transform_7, window_bounds = array<i64: 1, 32>}, {pipeline_mode = #tpu.pipeline_mode<synchronous>, transform_indices = @transform_8, window_bounds = array<i64: 1, 32>}, {pipeline_mode = #tpu.pipeline_mode<synchronous>, transform_indices = @transform_9, window_bounds = array<i64: 1, 32>}, {pipeline_mode = #tpu.pipeline_mode<synchronous>, transform_indices = @transform_10, window_bounds = array<i64: 1, 32>}, {pipeline_mode = #tpu.pipeline_mode<synchronous>, transform_indices = @transform_11, window_bounds = array<i64: 1, 32>}, {transform_indices = @transform_12, window_bounds = array<i64: 1, 8, 32>}]} {
    %c0 = arith.constant 0 : index
    %c0_0 = arith.constant 0 : index
    %c0_1 = arith.constant 0 : index
    %0 = vector.load %arg1[%c0, %c0_0, %c0_1] : memref<1x8x32xf32, #tpu.memory_space<vmem>>, vector<1x8x32xf32>
    %1 = vector.shape_cast %0 : vector<1x8x32xf32> to vector<8x32xf32>
    %c0_2 = arith.constant 0 : index
    %c0_3 = arith.constant 0 : index
    %2 = vector.load %arg9[%c0_2, %c0_3] : memref<1x32xf32, #tpu.memory_space<vmem>>, vector<1x32xf32>
    %3 = vector.shape_cast %2 : vector<1x32xf32> to vector<32xf32>
    %c0_4 = arith.constant 0 : index
    %c0_5 = arith.constant 0 : index
    %4 = vector.load %arg10[%c0_4, %c0_5] : memref<1x32xf32, #tpu.memory_space<vmem>>, vector<1x32xf32>
    %5 = vector.shape_cast %4 : vector<1x32xf32> to vector<32xf32>
    %cst = arith.constant dense<0.000000e+00> : vector<8xf32>
    %6 = vector.multi_reduction <add>, %1, %cst [1] : vector<8x32xf32> to vector<8xf32>
    %7 = vector.shape_cast %6 : vector<8xf32> to vector<8x1xf32>
    %cst_6 = arith.constant 3.200000e+01 : f32
    %8 = vector.broadcast %cst_6 : f32 to vector<8x1xf32>
    %9 = arith.divf %7, %8 : vector<8x1xf32>
    %10 = vector.broadcast %9 : vector<8x1xf32> to vector<8x32xf32>
    %11 = arith.subf %1, %10 : vector<8x32xf32>
    %12 = arith.mulf %11, %11 : vector<8x32xf32>
    %cst_7 = arith.constant dense<0.000000e+00> : vector<8xf32>
    %13 = vector.multi_reduction <add>, %12, %cst_7 [1] : vector<8x32xf32> to vector<8xf32>
    %14 = vector.shape_cast %13 : vector<8xf32> to vector<8x1xf32>
    %cst_8 = arith.constant 3.200000e+01 : f32
    %15 = vector.broadcast %cst_8 : f32 to vector<8x1xf32>
    %16 = arith.divf %14, %15 : vector<8x1xf32>
    %17 = vector.broadcast %9 : vector<8x1xf32> to vector<8x32xf32>
    %18 = arith.subf %1, %17 : vector<8x32xf32>
    %cst_9 = arith.constant 9.99999974E-6 : f32
    %19 = vector.broadcast %cst_9 : f32 to vector<8x1xf32>
    %20 = arith.addf %16, %19 : vector<8x1xf32>
    %21 = math.rsqrt %20 : vector<8x1xf32>
    %22 = vector.broadcast %21 : vector<8x1xf32> to vector<8x32xf32>
    %23 = arith.mulf %18, %22 : vector<8x32xf32>
    %24 = vector.shape_cast %3 : vector<32xf32> to vector<1x32xf32>
    %25 = vector.broadcast %24 : vector<1x32xf32> to vector<8x32xf32>
    %26 = arith.mulf %23, %25 : vector<8x32xf32>
    %27 = vector.shape_cast %5 : vector<32xf32> to vector<1x32xf32>
    %28 = vector.broadcast %27 : vector<1x32xf32> to vector<8x32xf32>
    %29 = arith.addf %26, %28 : vector<8x32xf32>
    %c0_10 = arith.constant 0 : index
    %c0_11 = arith.constant 0 : index
    %30 = vector.load %arg2[%c0_10, %c0_11] : memref<32x96xf32, #tpu.memory_space<vmem>>, vector<32x96xf32>
    %cst_12 = arith.constant dense<0.000000e+00> : vector<8x96xf32>
    %31 = tpu.matmul %29, %30, %cst_12 {dimension_numbers = #tpu.dot_dimension_numbers<[1], [0], [0], [1], [0, 0, 1, 1], [], []>} : vector<8x32xf32>, vector<32x96xf32>, vector<8x96xf32> -> vector<8x96xf32>
    %cst_13 = arith.constant 3.200000e+01 : f32
    %cst_14 = arith.constant -5.000000e-01 : f32
    %32 = math.powf %cst_13, %cst_14 : f32
    %33 = vector.extract_strided_slice %31 {offsets = [0, 0], sizes = [8, 8], strides = [1, 1]} : vector<8x96xf32> to vector<8x8xf32>
    %34 = vector.broadcast %32 : f32 to vector<8x8xf32>
    %35 = arith.mulf %33, %34 : vector<8x8xf32>
    %c0_15 = arith.constant 0 : index
    %c0_16 = arith.constant 0 : index
    %c0_17 = arith.constant 0 : index
    %36 = vector.load %arg14[%c0_15, %c0_16, %c0_17] : memref<4x8x8xf32, #tpu.memory_space<vmem>>, vector<1x8x8xf32>
    %37 = vector.shape_cast %36 : vector<1x8x8xf32> to vector<8x8xf32>
    %38 = vector.shape_cast %35 : vector<8x8xf32> to vector<1x8x8xf32>
    tpu.vector_store %arg14[%c0_15, %c0_16, %c0_17], %38 {strides = array<i32>} : memref<4x8x8xf32, #tpu.memory_space<vmem>>, vector<1x8x8xf32>,
    %39 = vector.extract_strided_slice %31 {offsets = [0, 32], sizes = [8, 8], strides = [1, 1]} : vector<8x96xf32> to vector<8x8xf32>
    %c0_18 = arith.constant 0 : index
    %c0_19 = arith.constant 0 : index
    %c0_20 = arith.constant 0 : index
    %40 = vector.load %arg15[%c0_18, %c0_19, %c0_20] : memref<4x8x8xf32, #tpu.memory_space<vmem>>, vector<1x8x8xf32>
    %41 = vector.shape_cast %40 : vector<1x8x8xf32> to vector<8x8xf32>
    %42 = vector.shape_cast %39 : vector<8x8xf32> to vector<1x8x8xf32>
    tpu.vector_store %arg15[%c0_18, %c0_19, %c0_20], %42 {strides = array<i32>} : memref<4x8x8xf32, #tpu.memory_space<vmem>>, vector<1x8x8xf32>,
    %43 = vector.extract_strided_slice %31 {offsets = [0, 64], sizes = [8, 8], strides = [1, 1]} : vector<8x96xf32> to vector<8x8xf32>
    %c0_21 = arith.constant 0 : index
    %c0_22 = arith.constant 0 : index
    %c0_23 = arith.constant 0 : index
    %44 = vector.load %arg16[%c0_21, %c0_22, %c0_23] : memref<4x8x8xf32, #tpu.memory_space<vmem>>, vector<1x8x8xf32>
    %45 = vector.shape_cast %44 : vector<1x8x8xf32> to vector<8x8xf32>
    %46 = vector.shape_cast %43 : vector<8x8xf32> to vector<1x8x8xf32>
    tpu.vector_store %arg16[%c0_21, %c0_22, %c0_23], %46 {strides = array<i32>} : memref<4x8x8xf32, #tpu.memory_space<vmem>>, vector<1x8x8xf32>,
    %47 = vector.extract_strided_slice %31 {offsets = [0, 8], sizes = [8, 8], strides = [1, 1]} : vector<8x96xf32> to vector<8x8xf32>
    %48 = vector.broadcast %32 : f32 to vector<8x8xf32>
    %49 = arith.mulf %47, %48 : vector<8x8xf32>
    %c1 = arith.constant 1 : index
    %c0_24 = arith.constant 0 : index
    %c0_25 = arith.constant 0 : index
    %50 = vector.load %arg14[%c1, %c0_24, %c0_25] : memref<4x8x8xf32, #tpu.memory_space<vmem>>, vector<1x8x8xf32>
    %51 = vector.shape_cast %50 : vector<1x8x8xf32> to vector<8x8xf32>
    %52 = vector.shape_cast %49 : vector<8x8xf32> to vector<1x8x8xf32>
    tpu.vector_store %arg14[%c1, %c0_24, %c0_25], %52 {strides = array<i32>} : memref<4x8x8xf32, #tpu.memory_space<vmem>>, vector<1x8x8xf32>,
    %53 = vector.extract_strided_slice %31 {offsets = [0, 40], sizes = [8, 8], strides = [1, 1]} : vector<8x96xf32> to vector<8x8xf32>
    %c1_26 = arith.constant 1 : index
    %c0_27 = arith.constant 0 : index
    %c0_28 = arith.constant 0 : index
    %54 = vector.load %arg15[%c1_26, %c0_27, %c0_28] : memref<4x8x8xf32, #tpu.memory_space<vmem>>, vector<1x8x8xf32>
    %55 = vector.shape_cast %54 : vector<1x8x8xf32> to vector<8x8xf32>
    %56 = vector.shape_cast %53 : vector<8x8xf32> to vector<1x8x8xf32>
    tpu.vector_store %arg15[%c1_26, %c0_27, %c0_28], %56 {strides = array<i32>} : memref<4x8x8xf32, #tpu.memory_space<vmem>>, vector<1x8x8xf32>,
    %57 = vector.extract_strided_slice %31 {offsets = [0, 72], sizes = [8, 8], strides = [1, 1]} : vector<8x96xf32> to vector<8x8xf32>
    %c1_29 = arith.constant 1 : index
    %c0_30 = arith.constant 0 : index
    %c0_31 = arith.constant 0 : index
    %58 = vector.load %arg16[%c1_29, %c0_30, %c0_31] : memref<4x8x8xf32, #tpu.memory_space<vmem>>, vector<1x8x8xf32>
    %59 = vector.shape_cast %58 : vector<1x8x8xf32> to vector<8x8xf32>
    %60 = vector.shape_cast %57 : vector<8x8xf32> to vector<1x8x8xf32>
    tpu.vector_store %arg16[%c1_29, %c0_30, %c0_31], %60 {strides = array<i32>} : memref<4x8x8xf32, #tpu.memory_space<vmem>>, vector<1x8x8xf32>,
    %61 = vector.extract_strided_slice %31 {offsets = [0, 16], sizes = [8, 8], strides = [1, 1]} : vector<8x96xf32> to vector<8x8xf32>
    %62 = vector.broadcast %32 : f32 to vector<8x8xf32>
    %63 = arith.mulf %61, %62 : vector<8x8xf32>
    %c2 = arith.constant 2 : index
    %c0_32 = arith.constant 0 : index
    %c0_33 = arith.constant 0 : index
    %64 = vector.load %arg14[%c2, %c0_32, %c0_33] : memref<4x8x8xf32, #tpu.memory_space<vmem>>, vector<1x8x8xf32>
    %65 = vector.shape_cast %64 : vector<1x8x8xf32> to vector<8x8xf32>
    %66 = vector.shape_cast %63 : vector<8x8xf32> to vector<1x8x8xf32>
    tpu.vector_store %arg14[%c2, %c0_32, %c0_33], %66 {strides = array<i32>} : memref<4x8x8xf32, #tpu.memory_space<vmem>>, vector<1x8x8xf32>,
    %67 = vector.extract_strided_slice %31 {offsets = [0, 48], sizes = [8, 8], strides = [1, 1]} : vector<8x96xf32> to vector<8x8xf32>
    %c2_34 = arith.constant 2 : index
    %c0_35 = arith.constant 0 : index
    %c0_36 = arith.constant 0 : index
    %68 = vector.load %arg15[%c2_34, %c0_35, %c0_36] : memref<4x8x8xf32, #tpu.memory_space<vmem>>, vector<1x8x8xf32>
    %69 = vector.shape_cast %68 : vector<1x8x8xf32> to vector<8x8xf32>
    %70 = vector.shape_cast %67 : vector<8x8xf32> to vector<1x8x8xf32>
    tpu.vector_store %arg15[%c2_34, %c0_35, %c0_36], %70 {strides = array<i32>} : memref<4x8x8xf32, #tpu.memory_space<vmem>>, vector<1x8x8xf32>,
    %71 = vector.extract_strided_slice %31 {offsets = [0, 80], sizes = [8, 8], strides = [1, 1]} : vector<8x96xf32> to vector<8x8xf32>
    %c2_37 = arith.constant 2 : index
    %c0_38 = arith.constant 0 : index
    %c0_39 = arith.constant 0 : index
    %72 = vector.load %arg16[%c2_37, %c0_38, %c0_39] : memref<4x8x8xf32, #tpu.memory_space<vmem>>, vector<1x8x8xf32>
    %73 = vector.shape_cast %72 : vector<1x8x8xf32> to vector<8x8xf32>
    %74 = vector.shape_cast %71 : vector<8x8xf32> to vector<1x8x8xf32>
    tpu.vector_store %arg16[%c2_37, %c0_38, %c0_39], %74 {strides = array<i32>} : memref<4x8x8xf32, #tpu.memory_space<vmem>>, vector<1x8x8xf32>,
    %75 = vector.extract_strided_slice %31 {offsets = [0, 24], sizes = [8, 8], strides = [1, 1]} : vector<8x96xf32> to vector<8x8xf32>
    %76 = vector.broadcast %32 : f32 to vector<8x8xf32>
    %77 = arith.mulf %75, %76 : vector<8x8xf32>
    %c3 = arith.constant 3 : index
    %c0_40 = arith.constant 0 : index
    %c0_41 = arith.constant 0 : index
    %78 = vector.load %arg14[%c3, %c0_40, %c0_41] : memref<4x8x8xf32, #tpu.memory_space<vmem>>, vector<1x8x8xf32>
    %79 = vector.shape_cast %78 : vector<1x8x8xf32> to vector<8x8xf32>
    %80 = vector.shape_cast %77 : vector<8x8xf32> to vector<1x8x8xf32>
    tpu.vector_store %arg14[%c3, %c0_40, %c0_41], %80 {strides = array<i32>} : memref<4x8x8xf32, #tpu.memory_space<vmem>>, vector<1x8x8xf32>,
    %81 = vector.extract_strided_slice %31 {offsets = [0, 56], sizes = [8, 8], strides = [1, 1]} : vector<8x96xf32> to vector<8x8xf32>
    %c3_42 = arith.constant 3 : index
    %c0_43 = arith.constant 0 : index
    %c0_44 = arith.constant 0 : index
    %82 = vector.load %arg15[%c3_42, %c0_43, %c0_44] : memref<4x8x8xf32, #tpu.memory_space<vmem>>, vector<1x8x8xf32>
    %83 = vector.shape_cast %82 : vector<1x8x8xf32> to vector<8x8xf32>
    %84 = vector.shape_cast %81 : vector<8x8xf32> to vector<1x8x8xf32>
    tpu.vector_store %arg15[%c3_42, %c0_43, %c0_44], %84 {strides = array<i32>} : memref<4x8x8xf32, #tpu.memory_space<vmem>>, vector<1x8x8xf32>,
    %85 = vector.extract_strided_slice %31 {offsets = [0, 88], sizes = [8, 8], strides = [1, 1]} : vector<8x96xf32> to vector<8x8xf32>
    %c3_45 = arith.constant 3 : index
    %c0_46 = arith.constant 0 : index
    %c0_47 = arith.constant 0 : index
    %86 = vector.load %arg16[%c3_45, %c0_46, %c0_47] : memref<4x8x8xf32, #tpu.memory_space<vmem>>, vector<1x8x8xf32>
    %87 = vector.shape_cast %86 : vector<1x8x8xf32> to vector<8x8xf32>
    %88 = vector.shape_cast %85 : vector<8x8xf32> to vector<1x8x8xf32>
    tpu.vector_store %arg16[%c3_45, %c0_46, %c0_47], %88 {strides = array<i32>} : memref<4x8x8xf32, #tpu.memory_space<vmem>>, vector<1x8x8xf32>,
    %c0_48 = arith.constant 0 : index
    %c0_49 = arith.constant 0 : index
    %c0_50 = arith.constant 0 : index
    %89 = vector.load %arg14[%c0_48, %c0_49, %c0_50] : memref<4x8x8xf32, #tpu.memory_space<vmem>>, vector<4x8x8xf32>
    %c0_51 = arith.constant 0 : index
    %c0_52 = arith.constant 0 : index
    %c0_53 = arith.constant 0 : index
    %90 = vector.load %arg15[%c0_51, %c0_52, %c0_53] : memref<4x8x8xf32, #tpu.memory_space<vmem>>, vector<4x8x8xf32>
    %c0_54 = arith.constant 0 : index
    %c0_55 = arith.constant 0 : index
    %c0_56 = arith.constant 0 : index
    %91 = vector.load %arg16[%c0_54, %c0_55, %c0_56] : memref<4x8x8xf32, #tpu.memory_space<vmem>>, vector<4x8x8xf32>
    %92 = tpu.iota {dimensions = array<i32: 0>} : vector<8x8xi32>
    %93 = tpu.iota {dimensions = array<i32: 1>} : vector<8x8xi32>
    %94 = arith.cmpi sle, %93, %92 : vector<8x8xi32>
    %95 = vector.shape_cast %94 : vector<8x8xi1> to vector<1x8x8xi1>
    "tpu.trace_start"() <{level = 10 : i32, message = "htd,hsd->hts"}> : () -> ()
    %cst_57 = arith.constant dense<0.000000e+00> : vector<4x8x8xf32>
    %96 = tpu.matmul %89, %90, %cst_57 {dimension_numbers = #tpu.dot_dimension_numbers<[2], [2], [1], [1], [0, 0, 0, 1, 1, 1], [0], [0]>} : vector<4x8x8xf32>, vector<4x8x8xf32>, vector<4x8x8xf32> -> vector<4x8x8xf32>
    %cst_58 = arith.constant -1.000000e+30 : f32
    "tpu.trace_stop"() : () -> ()
    %97 = vector.shape_cast %95 : vector<1x8x8xi1> to vector<1x8x8xi1>
    %98 = vector.broadcast %97 : vector<1x8x8xi1> to vector<4x8x8xi1>
    %99 = vector.broadcast %cst_58 : f32 to vector<4x8x8xf32>
    %100 = arith.select %98, %96, %99 : vector<4x8x8xi1>, vector<4x8x8xf32>
    %cst_59 = arith.constant dense<0xFF800000> : vector<4x8xf32>
    %101 = vector.multi_reduction <maximumf>, %100, %cst_59 [2] : vector<4x8x8xf32> to vector<4x8xf32>
    %102 = vector.shape_cast %101 : vector<4x8xf32> to vector<4x8x1xf32>
    %103 = vector.broadcast %102 : vector<4x8x1xf32> to vector<4x8x8xf32>
    %104 = arith.subf %100, %103 : vector<4x8x8xf32>
    %105 = math.exp %104 : vector<4x8x8xf32>
    %cst_60 = arith.constant dense<0.000000e+00> : vector<4x8xf32>
    %106 = vector.multi_reduction <add>, %105, %cst_60 [2] : vector<4x8x8xf32> to vector<4x8xf32>
    %107 = vector.shape_cast %106 : vector<4x8xf32> to vector<4x8x1xf32>
    %108 = tpu.reciprocal %107 {approx = true} : vector<4x8x1xf32> -> vector<4x8x1xf32>
    %109 = vector.broadcast %108 : vector<4x8x1xf32> to vector<4x8x8xf32>
    %110 = arith.mulf %105, %109 : vector<4x8x8xf32>
    "tpu.trace_start"() <{level = 10 : i32, message = "hts,hsd->htd"}> : () -> ()
    %cst_61 = arith.constant dense<0.000000e+00> : vector<4x8x8xf32>
    %111 = tpu.matmul %110, %91, %cst_61 {dimension_numbers = #tpu.dot_dimension_numbers<[2], [1], [1], [2], [0, 0, 0, 1, 1, 2], [0], [0]>} : vector<4x8x8xf32>, vector<4x8x8xf32>, vector<4x8x8xf32> -> vector<4x8x8xf32>
    "tpu.trace_stop"() : () -> ()
    %112 = vector.extract_strided_slice %111 {offsets = [0, 0, 0], sizes = [1, 8, 8], strides = [1, 1, 1]} : vector<4x8x8xf32> to vector<1x8x8xf32>
    %113 = vector.shape_cast %112 : vector<1x8x8xf32> to vector<8x8xf32>
    %c0_62 = arith.constant 0 : index
    %c0_63 = arith.constant 0 : index
    %114 = vector.load %arg17[%c0_62, %c0_63] : memref<8x32xf32, #tpu.memory_space<vmem>>, vector<8x8xf32>
    tpu.vector_store %arg17[%c0_62, %c0_63], %113 {strides = array<i32>} : memref<8x32xf32, #tpu.memory_space<vmem>>, vector<8x8xf32>,
    %115 = vector.extract_strided_slice %111 {offsets = [1, 0, 0], sizes = [1, 8, 8], strides = [1, 1, 1]} : vector<4x8x8xf32> to vector<1x8x8xf32>
    %116 = vector.shape_cast %115 : vector<1x8x8xf32> to vector<8x8xf32>
    %c0_64 = arith.constant 0 : index
    %c8 = arith.constant 8 : index
    %117 = vector.load %arg17[%c0_64, %c8] : memref<8x32xf32, #tpu.memory_space<vmem>>, vector<8x8xf32>
    tpu.vector_store %arg17[%c0_64, %c8], %116 {strides = array<i32>} : memref<8x32xf32, #tpu.memory_space<vmem>>, vector<8x8xf32>,
    %118 = vector.extract_strided_slice %111 {offsets = [2, 0, 0], sizes = [1, 8, 8], strides = [1, 1, 1]} : vector<4x8x8xf32> to vector<1x8x8xf32>
    %119 = vector.shape_cast %118 : vector<1x8x8xf32> to vector<8x8xf32>
    %c0_65 = arith.constant 0 : index
    %c16 = arith.constant 16 : index
    %120 = vector.load %arg17[%c0_65, %c16] : memref<8x32xf32, #tpu.memory_space<vmem>>, vector<8x8xf32>
    tpu.vector_store %arg17[%c0_65, %c16], %119 {strides = array<i32>} : memref<8x32xf32, #tpu.memory_space<vmem>>, vector<8x8xf32>,
    %121 = vector.extract_strided_slice %111 {offsets = [3, 0, 0], sizes = [1, 8, 8], strides = [1, 1, 1]} : vector<4x8x8xf32> to vector<1x8x8xf32>
    %122 = vector.shape_cast %121 : vector<1x8x8xf32> to vector<8x8xf32>
    %c0_66 = arith.constant 0 : index
    %c24 = arith.constant 24 : index
    %123 = vector.load %arg17[%c0_66, %c24] : memref<8x32xf32, #tpu.memory_space<vmem>>, vector<8x8xf32>
    tpu.vector_store %arg17[%c0_66, %c24], %122 {strides = array<i32>} : memref<8x32xf32, #tpu.memory_space<vmem>>, vector<8x8xf32>,
    %c0_67 = arith.constant 0 : index
    %c0_68 = arith.constant 0 : index
    %124 = vector.load %arg17[%c0_67, %c0_68] : memref<8x32xf32, #tpu.memory_space<vmem>>, vector<8x32xf32>
    %c0_69 = arith.constant 0 : index
    %c0_70 = arith.constant 0 : index
    %125 = vector.load %arg3[%c0_69, %c0_70] : memref<32x32xf32, #tpu.memory_space<vmem>>, vector<32x32xf32>
    %cst_71 = arith.constant dense<0.000000e+00> : vector<8x32xf32>
    %126 = tpu.matmul %124, %125, %cst_71 {dimension_numbers = #tpu.dot_dimension_numbers<[1], [0], [0], [1], [0, 0, 1, 1], [], []>} : vector<8x32xf32>, vector<32x32xf32>, vector<8x32xf32> -> vector<8x32xf32>
    %c0_72 = arith.constant 0 : index
    %c0_73 = arith.constant 0 : index
    %127 = vector.load %arg4[%c0_72, %c0_73] : memref<1x32xf32, #tpu.memory_space<vmem>>, vector<1x32xf32>
    %128 = vector.shape_cast %127 : vector<1x32xf32> to vector<32xf32>
    %129 = vector.shape_cast %128 : vector<32xf32> to vector<1x32xf32>
    %130 = vector.broadcast %129 : vector<1x32xf32> to vector<8x32xf32>
    %131 = arith.addf %126, %130 : vector<8x32xf32>
    %132 = arith.addf %1, %131 : vector<8x32xf32>
    %c0_74 = arith.constant 0 : index
    %c0_75 = arith.constant 0 : index
    %133 = vector.load %arg11[%c0_74, %c0_75] : memref<1x32xf32, #tpu.memory_space<vmem>>, vector<1x32xf32>
    %134 = vector.shape_cast %133 : vector<1x32xf32> to vector<32xf32>
    %c0_76 = arith.constant 0 : index
    %c0_77 = arith.constant 0 : index
    %135 = vector.load %arg12[%c0_76, %c0_77] : memref<1x32xf32, #tpu.memory_space<vmem>>, vector<1x32xf32>
    %136 = vector.shape_cast %135 : vector<1x32xf32> to vector<32xf32>
    %cst_78 = arith.constant dense<0.000000e+00> : vector<8xf32>
    %137 = vector.multi_reduction <add>, %132, %cst_78 [1] : vector<8x32xf32> to vector<8xf32>
    %138 = vector.shape_cast %137 : vector<8xf32> to vector<8x1xf32>
    %cst_79 = arith.constant 3.200000e+01 : f32
    %139 = vector.broadcast %cst_79 : f32 to vector<8x1xf32>
    %140 = arith.divf %138, %139 : vector<8x1xf32>
    %141 = vector.broadcast %140 : vector<8x1xf32> to vector<8x32xf32>
    %142 = arith.subf %132, %141 : vector<8x32xf32>
    %143 = arith.mulf %142, %142 : vector<8x32xf32>
    %cst_80 = arith.constant dense<0.000000e+00> : vector<8xf32>
    %144 = vector.multi_reduction <add>, %143, %cst_80 [1] : vector<8x32xf32> to vector<8xf32>
    %145 = vector.shape_cast %144 : vector<8xf32> to vector<8x1xf32>
    %cst_81 = arith.constant 3.200000e+01 : f32
    %146 = vector.broadcast %cst_81 : f32 to vector<8x1xf32>
    %147 = arith.divf %145, %146 : vector<8x1xf32>
    %148 = vector.broadcast %140 : vector<8x1xf32> to vector<8x32xf32>
    %149 = arith.subf %132, %148 : vector<8x32xf32>
    %cst_82 = arith.constant 9.99999974E-6 : f32
    %150 = vector.broadcast %cst_82 : f32 to vector<8x1xf32>
    %151 = arith.addf %147, %150 : vector<8x1xf32>
    %152 = math.rsqrt %151 : vector<8x1xf32>
    %153 = vector.broadcast %152 : vector<8x1xf32> to vector<8x32xf32>
    %154 = arith.mulf %149, %153 : vector<8x32xf32>
    %155 = vector.shape_cast %134 : vector<32xf32> to vector<1x32xf32>
    %156 = vector.broadcast %155 : vector<1x32xf32> to vector<8x32xf32>
    %157 = arith.mulf %154, %156 : vector<8x32xf32>
    %158 = vector.shape_cast %136 : vector<32xf32> to vector<1x32xf32>
    %159 = vector.broadcast %158 : vector<1x32xf32> to vector<8x32xf32>
    %160 = arith.addf %157, %159 : vector<8x32xf32>
    %cst_83 = arith.constant 0.000000e+00 : f32
    %161 = vector.broadcast %cst_83 : f32 to vector<8x32xf32>
    %c0_84 = arith.constant 0 : index
    %c0_85 = arith.constant 0 : index
    %162 = vector.load %arg5[%c0_84, %c0_85] : memref<32x128xf32, #tpu.memory_space<vmem>>, vector<32x128xf32>
    %cst_86 = arith.constant dense<0.000000e+00> : vector<8x128xf32>
    %163 = tpu.matmul %160, %162, %cst_86 {dimension_numbers = #tpu.dot_dimension_numbers<[1], [0], [0], [1], [0, 0, 1, 1], [], []>} : vector<8x32xf32>, vector<32x128xf32>, vector<8x128xf32> -> vector<8x128xf32>
    %c0_87 = arith.constant 0 : index
    %c0_88 = arith.constant 0 : index
    %164 = vector.load %arg6[%c0_87, %c0_88] : memref<1x128xf32, #tpu.memory_space<vmem>>, vector<1x128xf32>
    %165 = vector.shape_cast %164 : vector<1x128xf32> to vector<128xf32>
    %166 = vector.shape_cast %165 : vector<128xf32> to vector<1x128xf32>
    %167 = vector.broadcast %166 : vector<1x128xf32> to vector<8x128xf32>
    %168 = arith.addf %163, %167 : vector<8x128xf32>
    %cst_89 = arith.constant 0.000000e+00 : f32
    %169 = vector.broadcast %cst_89 : f32 to vector<8x128xf32>
    %170 = arith.maximumf %168, %169 : vector<8x128xf32>
    %c0_90 = arith.constant 0 : index
    %c0_91 = arith.constant 0 : index
    %171 = vector.load %arg7[%c0_90, %c0_91] : memref<128x32xf32, #tpu.memory_space<vmem>>, vector<128x32xf32>
    %cst_92 = arith.constant dense<0.000000e+00> : vector<8x32xf32>
    %172 = tpu.matmul %170, %171, %cst_92 {dimension_numbers = #tpu.dot_dimension_numbers<[1], [0], [0], [1], [0, 0, 1, 1], [], []>} : vector<8x128xf32>, vector<128x32xf32>, vector<8x32xf32> -> vector<8x32xf32>
    %173 = arith.addf %161, %172 : vector<8x32xf32>
    %174 = arith.addf %132, %173 : vector<8x32xf32>
    %c0_93 = arith.constant 0 : index
    %c0_94 = arith.constant 0 : index
    %175 = vector.load %arg8[%c0_93, %c0_94] : memref<1x32xf32, #tpu.memory_space<vmem>>, vector<1x32xf32>
    %176 = vector.shape_cast %175 : vector<1x32xf32> to vector<32xf32>
    %177 = vector.shape_cast %176 : vector<32xf32> to vector<1x32xf32>
    %178 = vector.broadcast %177 : vector<1x32xf32> to vector<8x32xf32>
    %179 = arith.addf %174, %178 : vector<8x32xf32>
    %c0_95 = arith.constant 0 : index
    %c0_96 = arith.constant 0 : index
    %c0_97 = arith.constant 0 : index
    %180 = vector.load %arg13[%c0_95, %c0_96, %c0_97] : memref<1x8x32xf32, #tpu.memory_space<vmem>>, vector<1x8x32xf32>
    %181 = vector.shape_cast %180 : vector<1x8x32xf32> to vector<8x32xf32>
    %182 = vector.shape_cast %179 : vector<8x32xf32> to vector<1x8x32xf32>
    tpu.vector_store %arg13[%c0_95, %c0_96, %c0_97], %182 {strides = array<i32>} : memref<1x8x32xf32, #tpu.memory_space<vmem>>, vector<1x8x32xf32>,
    return
  }
  func.func @transform_0(%arg0: i32) -> (i32, i32, i32) {
    %c0_i32 = arith.constant 0 : i32
    %c0_i32_0 = arith.constant 0 : i32
    %c0_i32_1 = arith.constant 0 : i32
    return %arg0, %c0_i32, %c0_i32_0 : i32, i32, i32
  }
  func.func @transform_1(%arg0: i32) -> (i32, i32) {
    %c0_i32 = arith.constant 0 : i32
    %c0_i32_0 = arith.constant 0 : i32
    %c0_i32_1 = arith.constant 0 : i32
    return %c0_i32, %c0_i32_0 : i32, i32
  }
  func.func @transform_2(%arg0: i32) -> (i32, i32) {
    %c0_i32 = arith.constant 0 : i32
    %c0_i32_0 = arith.constant 0 : i32
    %c0_i32_1 = arith.constant 0 : i32
    return %c0_i32, %c0_i32_0 : i32, i32
  }
  func.func @transform_3(%arg0: i32) -> (i32, i32) {
    %c0_i32 = arith.constant 0 : i32
    %c0_i32_0 = arith.constant 0 : i32
    %c0_i32_1 = arith.constant 0 : i32
    return %c0_i32, %c0_i32_0 : i32, i32
  }
  func.func @transform_4(%arg0: i32) -> (i32, i32) {
    %c0_i32 = arith.constant 0 : i32
    %c0_i32_0 = arith.constant 0 : i32
    %c0_i32_1 = arith.constant 0 : i32
    return %c0_i32, %c0_i32_0 : i32, i32
  }
  func.func @transform_5(%arg0: i32) -> (i32, i32) {
    %c0_i32 = arith.constant 0 : i32
    %c0_i32_0 = arith.constant 0 : i32
    %c0_i32_1 = arith.constant 0 : i32
    return %c0_i32, %c0_i32_0 : i32, i32
  }
  func.func @transform_6(%arg0: i32) -> (i32, i32) {
    %c0_i32 = arith.constant 0 : i32
    %c0_i32_0 = arith.constant 0 : i32
    %c0_i32_1 = arith.constant 0 : i32
    return %c0_i32, %c0_i32_0 : i32, i32
  }
  func.func @transform_7(%arg0: i32) -> (i32, i32) {
    %c0_i32 = arith.constant 0 : i32
    %c0_i32_0 = arith.constant 0 : i32
    %c0_i32_1 = arith.constant 0 : i32
    return %c0_i32, %c0_i32_0 : i32, i32
  }
  func.func @transform_8(%arg0: i32) -> (i32, i32) {
    %c0_i32 = arith.constant 0 : i32
    %c0_i32_0 = arith.constant 0 : i32
    %c0_i32_1 = arith.constant 0 : i32
    return %c0_i32, %c0_i32_0 : i32, i32
  }
  func.func @transform_9(%arg0: i32) -> (i32, i32) {
    %c0_i32 = arith.constant 0 : i32
    %c0_i32_0 = arith.constant 0 : i32
    %c0_i32_1 = arith.constant 0 : i32
    return %c0_i32, %c0_i32_0 : i32, i32
  }
  func.func @transform_10(%arg0: i32) -> (i32, i32) {
    %c0_i32 = arith.constant 0 : i32
    %c0_i32_0 = arith.constant 0 : i32
    %c0_i32_1 = arith.constant 0 : i32
    return %c0_i32, %c0_i32_0 : i32, i32
  }
  func.func @transform_11(%arg0: i32) -> (i32, i32) {
    %c0_i32 = arith.constant 0 : i32
    %c0_i32_0 = arith.constant 0 : i32
    %c0_i32_1 = arith.constant 0 : i32
    return %c0_i32, %c0_i32_0 : i32, i32
  }
  func.func @transform_12(%arg0: i32) -> (i32, i32, i32) {
    %c0_i32 = arith.constant 0 : i32
    %c0_i32_0 = arith.constant 0 : i32
    %c0_i32_1 = arith.constant 0 : i32
    return %arg0, %c0_i32, %c0_i32_0 : i32, i32, i32
  }
}

</mosaic_0001>

<llo_original>
// kernel: tpu_custom_call.1
$region0: #{tpu_custom_call.1}
  #allocation0 [shape = 'u32[]', space=smem, size = 0x4, offset = 0x4, fixed_abs, tag = 'smem constant byte address 0x4 - core index']
  #allocation1 [shape = 'u32[144,128]{1,0:T(1,128)}', space=vmem, size = 0x12000, scoped, tag = 'internal scratch']
  #allocation2 [shape = 'f32[4,8,8]{2,1,0:T(8,128)}', space=vmem, size = 0x4000, scoped, tag = 'scratch operand']
  #allocation3 [shape = 'f32[4,8,8]{2,1,0:T(8,128)}', space=vmem, size = 0x4000, scoped, tag = 'scratch operand']
  #allocation4 [shape = 'f32[4,8,8]{2,1,0:T(8,128)}', space=vmem, size = 0x4000, scoped, tag = 'scratch operand']
  #allocation5 [shape = 'f32[8,32]{1,0:T(8,128)}', space=vmem, size = 0x1000, scoped, tag = 'scratch operand']
  %s0 = inlined_call_operand.hbm [shape: f32[2,8,32], index: 0, kind: input, shape index: {}]
  %s1 = inlined_call_operand.hbm [shape: f32[32,96], index: 1, kind: input, shape index: {}]
  %s2 = inlined_call_operand.hbm [shape: f32[32,32], index: 2, kind: input, shape index: {}]
  %s3 = inlined_call_operand.hbm [shape: f32[1,32], index: 3, kind: input, shape index: {}]
  %s4 = inlined_call_operand.hbm [shape: f32[32,128], index: 4, kind: input, shape index: {}]
  %s5 = inlined_call_operand.hbm [shape: f32[1,128], index: 5, kind: input, shape index: {}]
  %s6 = inlined_call_operand.hbm [shape: f32[128,32], index: 6, kind: input, shape index: {}]
  %s7 = inlined_call_operand.hbm [shape: f32[1,32], index: 7, kind: input, shape index: {}]
  %s8 = inlined_call_operand.hbm [shape: f32[1,32], index: 8, kind: input, shape index: {}]
  %s9 = inlined_call_operand.hbm [shape: f32[1,32], index: 9, kind: input, shape index: {}]
  %s10 = inlined_call_operand.hbm [shape: f32[1,32], index: 10, kind: input, shape index: {}]
  %s11 = inlined_call_operand.hbm [shape: f32[1,32], index: 11, kind: input, shape index: {}]
  %s12 = inlined_call_operand.hbm [shape: f32[2,8,32], index: 12, kind: output, shape index: {}]
  %s13 = sld [smem:[#allocation0]]
  $region129: #{tpu_custom_call.1} parent=0
    _
  %s15 = ssub.s32 1, %s13
  %s16 = scalar_select 0, %s15, %s13
  $region1: #{tpu_custom_call.1} parent=0
    #allocation6 [shape = 'u8[8192]{0}', space=vmem, size = 0x2000, scoped, tag = 'input window, operand 0']
    #allocation7 [shape = 's32[2]{0}', space=sflag, size = 0x8, scoped, tag = 'scoped memory for tpu_custom_call.1']
    #allocation8 [shape = 's32[2]{0}', space=sflag, size = 0x8, scoped, tag = 'scoped memory for tpu_custom_call.1']
    #allocation9 [shape = 'u8[16384]{0}', space=vmem, size = 0x4000, scoped, tag = 'input window, operand 1, single buffered']
    #allocation10 [shape = 's32[1]{0}', space=sflag, size = 0x4, scoped, tag = 'scoped memory for tpu_custom_call.1']
    #allocation11 [shape = 'u8[16384]{0}', space=vmem, size = 0x4000, scoped, tag = 'input window, operand 2, single buffered']
    #allocation12 [shape = 'u8[512]{0}', space=vmem, size = 0x400, scoped, tag = 'input window, operand 3, single buffered']
    #allocation13 [shape = 's32[1]{0}', space=sflag, size = 0x4, scoped, tag = 'scoped memory for tpu_custom_call.1']
    #allocation14 [shape = 'u8[16384]{0}', space=vmem, size = 0x4000, scoped, tag = 'input window, operand 4, single buffered']
    #allocation15 [shape = 'u8[512]{0}', space=vmem, size = 0x400, scoped, tag = 'input window, operand 5, single buffered']
    #allocation16 [shape = 's32[1]{0}', space=sflag, size = 0x4, scoped, tag = 'scoped memory for tpu_custom_call.1']
    #allocation17 [shape = 'u8[65536]{0}', space=vmem, size = 0x10000, scoped, tag = 'input window, operand 6, single buffered']
    #allocation18 [shape = 'u8[512]{0}', space=vmem, size = 0x400, scoped, tag = 'input window, operand 7, single buffered']
    #allocation19 [shape = 's32[1]{0}', space=sflag, size = 0x4, scoped, tag = 'scoped memory for tpu_custom_call.1']
    #allocation20 [shape = 'u8[512]{0}', space=vmem, size = 0x400, scoped, tag = 'input window, operand 8, single buffered']
    #allocation21 [shape = 'u8[512]{0}', space=vmem, size = 0x400, scoped, tag = 'input window, operand 9, single buffered']
    #allocation22 [shape = 's32[1]{0}', space=sflag, size = 0x4, scoped, tag = 'scoped memory for tpu_custom_call.1']
    #allocation23 [shape = 'u8[512]{0}', space=vmem, size = 0x400, scoped, tag = 'input window, operand 10, single buffered']
    #allocation24 [shape = 'u8[512]{0}', space=vmem, size = 0x400, scoped, tag = 'input window, operand 11, single buffered']
    #allocation25 [shape = 's32[1]{0}', space=sflag, size = 0x4, scoped, tag = 'scoped memory for tpu_custom_call.1']
    #allocation26 [shape = 'u8[8192]{0}', space=vmem, size = 0x2000, scoped, tag = 'output window, operand 0']
    %17 = vsyncpa [#allocation7], 0
    %s18 = scalar_lea.sflag [#allocation7], 1
    %19 = vsyncpa %s18, 0
    %20 = vsyncpa [#allocation10], 0
    %21 = vsyncpa [#allocation13], 0
    %22 = vsyncpa [#allocation16], 0
    %23 = vsyncpa [#allocation19], 0
    %24 = vsyncpa [#allocation22], 0
    %25 = vsyncpa [#allocation25], 0
    %26 = vsyncpa [#allocation8], 0
    %s27 = scalar_lea.sflag [#allocation8], 1
    %28 = vsyncpa %s27, 0
    loop: start=0, step=1, limit=4
    $region2: #{tpu_custom_call.1} parent=1 // loop_pre_header
      _
    $region3: #{tpu_custom_call.1} parent=1 // loop_header
      %s30 = sphi 0, %s34
      %p31 = scmp.ge.s32.totalorder %s30, 4
      %s40 = sphi 0, %s42
      %s43 = sphi 0, %s40
      %s44 = sphi 0, %s43
      %s60 = sphi 0, %s44
      %s64 = sphi 0, %s64
      %s66 = sphi 0, %s64
      %s67 = sphi 0, %s66
      %s81 = sphi 0, %s67
      %s85 = sphi 0, %s85
      %s87 = sphi 0, %s85
      %s88 = sphi 0, %s87
      %s102 = sphi 0, %s88
      %s106 = sphi 0, %s106
      %s108 = sphi 0, %s106
      %s109 = sphi 0, %s108
      %s123 = sphi 0, %s109
      %s127 = sphi 0, %s127
      %s129 = sphi 0, %s127
      %s130 = sphi 0, %s129
      %s144 = sphi 0, %s130
      %s148 = sphi 0, %s148
      %s150 = sphi 0, %s148
      %s151 = sphi 0, %s150
      %s165 = sphi 0, %s151
      %s169 = sphi 0, %s169
      %s171 = sphi 0, %s169
      %s172 = sphi 0, %s171
      %s186 = sphi 0, %s172
      %s190 = sphi 0, %s190
      %s192 = sphi 0, %s190
      %s193 = sphi 0, %s192
      %s207 = sphi 0, %s193
      %s211 = sphi 0, %s211
      %s213 = sphi 0, %s211
      %s214 = sphi 0, %s213
      %s228 = sphi 0, %s214
      %s232 = sphi 0, %s232
      %s234 = sphi 0, %s232
      %s235 = sphi 0, %s234
      %s249 = sphi 0, %s235
      %s253 = sphi 0, %s253
      %s255 = sphi 0, %s253
      %s256 = sphi 0, %s255
      %s270 = sphi 0, %s256
      %s274 = sphi 0, %s274
      %s276 = sphi 0, %s274
      %s277 = sphi 0, %s276
      %s291 = sphi 0, %s277
      %s297 = sphi 0, %s299
      %s300 = sphi 0, %s297
      %s301 = sphi 0, %s300
      %s317 = sphi 0, %s301
    $region4: #{tpu_custom_call.1} parent=1 // loop_header_branch
      %33 = sbr.rel (%p31) target = $region8
    $region5: #{tpu_custom_call.1} parent=1 // loop_body
      %s35 = ssub.s32 %s30, 1
      %s36 = ssub.s32 %s30, 2
      %s37 = sadd.s32 %s30, 1
      %s38 = ssub.s32 %s30, %s37
      %p39 = scmp.eq.s32.totalorder %s38, 0
      %s41 = sadd.s32 %s40, 1
      %s42 = scalar_select %p39, %s40, %s41
      %p45 = pneg %p39
      %p46 = scmp.eq.s32.totalorder %s30, 1
      %p47 = por %p45, %p46
      %p48 = scmp.ne.s32.totalorder %s40, %s43
      %p49 = scmp.eq.s32.totalorder %s30, 0
      %p50 = por %p48, %p49
      %p51 = scmp.ne.s32.totalorder %s40, %s43
      %p52 = scmp.eq.s32.totalorder %s35, 1
      %p53 = por %p51, %p52
      %p54 = scmp.ne.s32.totalorder %s43, %s44
      %p55 = scmp.eq.s32.totalorder %s35, 0
      %p56 = por %p54, %p55
      %p57 = scmp.ne.s32.totalorder %s43, %s44
      %p58 = scmp.eq.s32.totalorder %s36, 1
      %p59 = por %p57, %p58
      %p61 = scmp.ne.s32.totalorder %s44, %s60
      %p62 = scmp.eq.s32.totalorder %s36, 0
      %p63 = por %p61, %p62
      %s65 = sadd.s32 %s64, 1
      %p68 = scmp.eq.s32.totalorder %s30, 1
      %p69 = scmp.ne.s32.totalorder %s64, %s66
      %p70 = scmp.eq.s32.totalorder %s30, 0
      %p71 = por %p69, %p70
      %p72 = scmp.ne.s32.totalorder %s64, %s66
      %p73 = scmp.eq.s32.totalorder %s35, 1
      %p74 = por %p72, %p73
      %p75 = scmp.ne.s32.totalorder %s66, %s67
      %p76 = scmp.eq.s32.totalorder %s35, 0
      %p77 = por %p75, %p76
      %p78 = scmp.ne.s32.totalorder %s66, %s67
      %p79 = scmp.eq.s32.totalorder %s36, 1
      %p80 = por %p78, %p79
      %p82 = scmp.ne.s32.totalorder %s67, %s81
      %p83 = scmp.eq.s32.totalorder %s36, 0
      %p84 = por %p82, %p83
      %s86 = sadd.s32 %s85, 1
      %p89 = scmp.eq.s32.totalorder %s30, 1
      %p90 = scmp.ne.s32.totalorder %s85, %s87
      %p91 = scmp.eq.s32.totalorder %s30, 0
      %p92 = por %p90, %p91
      %p93 = scmp.ne.s32.totalorder %s85, %s87
      %p94 = scmp.eq.s32.totalorder %s35, 1
      %p95 = por %p93, %p94
      %p96 = scmp.ne.s32.totalorder %s87, %s88
      %p97 = scmp.eq.s32.totalorder %s35, 0
      %p98 = por %p96, %p97
      %p99 = scmp.ne.s32.totalorder %s87, %s88
      %p100 = scmp.eq.s32.totalorder %s36, 1
      %p101 = por %p99, %p100
      %p103 = scmp.ne.s32.totalorder %s88, %s102
      %p104 = scmp.eq.s32.totalorder %s36, 0
      %p105 = por %p103, %p104
      %s107 = sadd.s32 %s106, 1
      %p110 = scmp.eq.s32.totalorder %s30, 1
      %p111 = scmp.ne.s32.totalorder %s106, %s108
      %p112 = scmp.eq.s32.totalorder %s30, 0
      %p113 = por %p111, %p112
      %p114 = scmp.ne.s32.totalorder %s106, %s108
      %p115 = scmp.eq.s32.totalorder %s35, 1
      %p116 = por %p114, %p115
      %p117 = scmp.ne.s32.totalorder %s108, %s109
      %p118 = scmp.eq.s32.totalorder %s35, 0
      %p119 = por %p117, %p118
      %p120 = scmp.ne.s32.totalorder %s108, %s109
      %p121 = scmp.eq.s32.totalorder %s36, 1
      %p122 = por %p120, %p121
      %p124 = scmp.ne.s32.totalorder %s109, %s123
      %p125 = scmp.eq.s32.totalorder %s36, 0
      %p126 = por %p124, %p125
      %s128 = sadd.s32 %s127, 1
      %p131 = scmp.eq.s32.totalorder %s30, 1
      %p132 = scmp.ne.s32.totalorder %s127, %s129
      %p133 = scmp.eq.s32.totalorder %s30, 0
      %p134 = por %p132, %p133
      %p135 = scmp.ne.s32.totalorder %s127, %s129
      %p136 = scmp.eq.s32.totalorder %s35, 1
      %p137 = por %p135, %p136
      %p138 = scmp.ne.s32.totalorder %s129, %s130
      %p139 = scmp.eq.s32.totalorder %s35, 0
      %p140 = por %p138, %p139
      %p141 = scmp.ne.s32.totalorder %s129, %s130
      %p142 = scmp.eq.s32.totalorder %s36, 1
      %p143 = por %p141, %p142
      %p145 = scmp.ne.s32.totalorder %s130, %s144
      %p146 = scmp.eq.s32.totalorder %s36, 0
      %p147 = por %p145, %p146
      %s149 = sadd.s32 %s148, 1
      %p152 = scmp.eq.s32.totalorder %s30, 1
      %p153 = scmp.ne.s32.totalorder %s148, %s150
      %p154 = scmp.eq.s32.totalorder %s30, 0
      %p155 = por %p153, %p154
      %p156 = scmp.ne.s32.totalorder %s148, %s150
      %p157 = scmp.eq.s32.totalorder %s35, 1
      %p158 = por %p156, %p157
      %p159 = scmp.ne.s32.totalorder %s150, %s151
      %p160 = scmp.eq.s32.totalorder %s35, 0
      %p161 = por %p159, %p160
      %p162 = scmp.ne.s32.totalorder %s150, %s151
      %p163 = scmp.eq.s32.totalorder %s36, 1
      %p164 = por %p162, %p163
      %p166 = scmp.ne.s32.totalorder %s151, %s165
      %p167 = scmp.eq.s32.totalorder %s36, 0
      %p168 = por %p166, %p167
      %s170 = sadd.s32 %s169, 1
      %p173 = scmp.eq.s32.totalorder %s30, 1
      %p174 = scmp.ne.s32.totalorder %s169, %s171
      %p175 = scmp.eq.s32.totalorder %s30, 0
      %p176 = por %p174, %p175
      %p177 = scmp.ne.s32.totalorder %s169, %s171
      %p178 = scmp.eq.s32.totalorder %s35, 1
      %p179 = por %p177, %p178
      %p180 = scmp.ne.s32.totalorder %s171, %s172
      %p181 = scmp.eq.s32.totalorder %s35, 0
      %p182 = por %p180, %p181
      %p183 = scmp.ne.s32.totalorder %s171, %s172
      %p184 = scmp.eq.s32.totalorder %s36, 1
      %p185 = por %p183, %p184
      %p187 = scmp.ne.s32.totalorder %s172, %s186
      %p188 = scmp.eq.s32.totalorder %s36, 0
      %p189 = por %p187, %p188
      %s191 = sadd.s32 %s190, 1
      %p194 = scmp.eq.s32.totalorder %s30, 1
      %p195 = scmp.ne.s32.totalorder %s190, %s192
      %p196 = scmp.eq.s32.totalorder %s30, 0
      %p197 = por %p195, %p196
      %p198 = scmp.ne.s32.totalorder %s190, %s192
      %p199 = scmp.eq.s32.totalorder %s35, 1
      %p200 = por %p198, %p199
      %p201 = scmp.ne.s32.totalorder %s192, %s193
      %p202 = scmp.eq.s32.totalorder %s35, 0
      %p203 = por %p201, %p202
      %p204 = scmp.ne.s32.totalorder %s192, %s193
      %p205 = scmp.eq.s32.totalorder %s36, 1
      %p206 = por %p204, %p205
      %p208 = scmp.ne.s32.totalorder %s193, %s207
      %p209 = scmp.eq.s32.totalorder %s36, 0
      %p210 = por %p208, %p209
      %s212 = sadd.s32 %s211, 1
      %p215 = scmp.eq.s32.totalorder %s30, 1
      %p216 = scmp.ne.s32.totalorder %s211, %s213
      %p217 = scmp.eq.s32.totalorder %s30, 0
      %p218 = por %p216, %p217
      %p219 = scmp.ne.s32.totalorder %s211, %s213
      %p220 = scmp.eq.s32.totalorder %s35, 1
      %p221 = por %p219, %p220
      %p222 = scmp.ne.s32.totalorder %s213, %s214
      %p223 = scmp.eq.s32.totalorder %s35, 0
      %p224 = por %p222, %p223
      %p225 = scmp.ne.s32.totalorder %s213, %s214
      %p226 = scmp.eq.s32.totalorder %s36, 1
      %p227 = por %p225, %p226
      %p229 = scmp.ne.s32.totalorder %s214, %s228
      %p230 = scmp.eq.s32.totalorder %s36, 0
      %p231 = por %p229, %p230
      %s233 = sadd.s32 %s232, 1
      %p236 = scmp.eq.s32.totalorder %s30, 1
      %p237 = scmp.ne.s32.totalorder %s232, %s234
      %p238 = scmp.eq.s32.totalorder %s30, 0
      %p239 = por %p237, %p238
      %p240 = scmp.ne.s32.totalorder %s232, %s234
      %p241 = scmp.eq.s32.totalorder %s35, 1
      %p242 = por %p240, %p241
      %p243 = scmp.ne.s32.totalorder %s234, %s235
      %p244 = scmp.eq.s32.totalorder %s35, 0
      %p245 = por %p243, %p244
      %p246 = scmp.ne.s32.totalorder %s234, %s235
      %p247 = scmp.eq.s32.totalorder %s36, 1
      %p248 = por %p246, %p247
      %p250 = scmp.ne.s32.totalorder %s235, %s249
      %p251 = scmp.eq.s32.totalorder %s36, 0
      %p252 = por %p250, %p251
      %s254 = sadd.s32 %s253, 1
      %p257 = scmp.eq.s32.totalorder %s30, 1
      %p258 = scmp.ne.s32.totalorder %s253, %s255
      %p259 = scmp.eq.s32.totalorder %s30, 0
      %p260 = por %p258, %p259
      %p261 = scmp.ne.s32.totalorder %s253, %s255
      %p262 = scmp.eq.s32.totalorder %s35, 1
      %p263 = por %p261, %p262
      %p264 = scmp.ne.s32.totalorder %s255, %s256
      %p265 = scmp.eq.s32.totalorder %s35, 0
      %p266 = por %p264, %p265
      %p267 = scmp.ne.s32.totalorder %s255, %s256
      %p268 = scmp.eq.s32.totalorder %s36, 1
      %p269 = por %p267, %p268
      %p271 = scmp.ne.s32.totalorder %s256, %s270
      %p272 = scmp.eq.s32.totalorder %s36, 0
      %p273 = por %p271, %p272
      %s275 = sadd.s32 %s274, 1
      %p278 = scmp.eq.s32.totalorder %s30, 1
      %p279 = scmp.ne.s32.totalorder %s274, %s276
      %p280 = scmp.eq.s32.totalorder %s30, 0
      %p281 = por %p279, %p280
      %p282 = scmp.ne.s32.totalorder %s274, %s276
      %p283 = scmp.eq.s32.totalorder %s35, 1
      %p284 = por %p282, %p283
      %p285 = scmp.ne.s32.totalorder %s276, %s277
      %p286 = scmp.eq.s32.totalorder %s35, 0
      %p287 = por %p285, %p286
      %p288 = scmp.ne.s32.totalorder %s276, %s277
      %p289 = scmp.eq.s32.totalorder %s36, 1
      %p290 = por %p288, %p289
      %p292 = scmp.ne.s32.totalorder %s277, %s291
      %p293 = scmp.eq.s32.totalorder %s36, 0
      %p294 = por %p292, %p293
      %s295 = ssub.s32 %s30, %s37
      %p296 = scmp.eq.s32.totalorder %s295, 0
      %s298 = sadd.s32 %s297, 1
      %s299 = scalar_select %p296, %s297, %s298
      %p302 = pneg %p296
      %p303 = scmp.eq.s32.totalorder %s30, 1
      %p304 = por %p302, %p303
      %p305 = scmp.ne.s32.totalorder %s297, %s300
      %p306 = scmp.eq.s32.totalorder %s30, 0
      %p307 = por %p305, %p306
      %p308 = scmp.ne.s32.totalorder %s297, %s300
      %p309 = scmp.eq.s32.totalorder %s35, 1
      %p310 = por %p308, %p309
      %p311 = scmp.ne.s32.totalorder %s300, %s301
      %p312 = scmp.eq.s32.totalorder %s35, 0
      %p313 = por %p311, %p312
      %p314 = scmp.ne.s32.totalorder %s300, %s301
      %p315 = scmp.eq.s32.totalorder %s36, 1
      %p316 = por %p314, %p315
      %p318 = scmp.ne.s32.totalorder %s301, %s317
      %p319 = scmp.eq.s32.totalorder %s36, 0
      %p320 = por %p318, %p319
      %p321 = scmp.le.s32.totalorder 1, %s30
      %p322 = scmp.lt.s32.totalorder %s30, 3
      %p323 = pnand %p321, %p322
      %p324 = pneg %p323
      // Predicated region
      $region9: #{tpu_custom_call.1} parent=5 // pred_check
        _
      $region10: #{tpu_custom_call.1} parent=5 // pred_check_branch
        %326 = sbr.rel (%p323) target = $region12
      $region11: #{tpu_custom_call.1} parent=5 // pred_region
        %s327 = ssub.s32 %s30, 1
        // Predicated region
        $region13: #{tpu_custom_call.1} parent=11 // pred_check
          %p328 = pneg %p77
        $region14: #{tpu_custom_call.1} parent=11 // pred_check_branch
          %330 = sbr.rel (%p328) target = $region16
        $region15: #{tpu_custom_call.1} parent=11 // pred_region
          %s332 = ssub.s32 512, 512
          %333 = vsyncadd [#allocation10], %s332
          %s334 = sshll.u32 [#allocation9], 4
          %s335 = int_to_ptr.vmem [resolvable:$true] %s334
          %340 = dma.hbm_to_vmem [thread:$0]  %s1, 512, %s335, [#allocation10], 128, 128, 8
        $region16: #{tpu_custom_call.1} parent=11 // pred_fallthru
          _
        // Predicated region
        $region17: #{tpu_custom_call.1} parent=11 // pred_check
          %p341 = pneg %p98
        $region18: #{tpu_custom_call.1} parent=11 // pred_check_branch
          %343 = sbr.rel (%p341) target = $region20
        $region19: #{tpu_custom_call.1} parent=11 // pred_region
          %s345 = ssub.s32 512, 512
          %346 = vsyncadd [#allocation10], %s345
          %s347 = sshll.u32 [#allocation11], 4
          %s348 = int_to_ptr.vmem [resolvable:$true] %s347
          %353 = dma.hbm_to_vmem [thread:$0]  %s2, 512, %s348, [#allocation10], 128, 128, 8
        $region20: #{tpu_custom_call.1} parent=11 // pred_fallthru
          _
        // Predicated region
        $region21: #{tpu_custom_call.1} parent=11 // pred_check
          %p354 = pneg %p119
        $region22: #{tpu_custom_call.1} parent=11 // pred_check_branch
          %356 = sbr.rel (%p354) target = $region24
        $region23: #{tpu_custom_call.1} parent=11 // pred_region
          %s358 = ssub.s32 16, 16
          %359 = vsyncadd [#allocation13], %s358
          %s361 = sshll.u32 [#allocation12], 4
          %s362 = int_to_ptr.vmem [resolvable:$true] %s361
          %364 = dma.hbm_to_vmem [thread:$0]  %s3, 16, %s362, [#allocation13]
        $region24: #{tpu_custom_call.1} parent=11 // pred_fallthru
          _
        // Predicated region
        $region25: #{tpu_custom_call.1} parent=11 // pred_check
          %p365 = pneg %p140
        $region26: #{tpu_custom_call.1} parent=11 // pred_check_branch
          %367 = sbr.rel (%p365) target = $region28
        $region27: #{tpu_custom_call.1} parent=11 // pred_region
          %s369 = ssub.s32 512, 512
          %370 = vsyncadd [#allocation13], %s369
          %s371 = sshll.u32 [#allocation14], 4
          %s372 = int_to_ptr.vmem [resolvable:$true] %s371
          %377 = dma.hbm_to_vmem [thread:$0]  %s4, 512, %s372, [#allocation13], 128, 128, 8
        $region28: #{tpu_custom_call.1} parent=11 // pred_fallthru
          _
        // Predicated region
        $region29: #{tpu_custom_call.1} parent=11 // pred_check
          %p378 = pneg %p161
        $region30: #{tpu_custom_call.1} parent=11 // pred_check_branch
          %380 = sbr.rel (%p378) target = $region32
        $region31: #{tpu_custom_call.1} parent=11 // pred_region
          %s382 = ssub.s32 16, 16
          %383 = vsyncadd [#allocation16], %s382
          %s385 = sshll.u32 [#allocation15], 4
          %s386 = int_to_ptr.vmem [resolvable:$true] %s385
          %388 = dma.hbm_to_vmem [thread:$0]  %s5, 16, %s386, [#allocation16]
        $region32: #{tpu_custom_call.1} parent=11 // pred_fallthru
          _
        // Predicated region
        $region33: #{tpu_custom_call.1} parent=11 // pred_check
          %p389 = pneg %p182
        $region34: #{tpu_custom_call.1} parent=11 // pred_check_branch
          %391 = sbr.rel (%p389) target = $region36
        $region35: #{tpu_custom_call.1} parent=11 // pred_region
          %s393 = ssub.s32 2048, 2048
          %394 = vsyncadd [#allocation16], %s393
          %s395 = sshll.u32 [#allocation17], 4
          %s396 = int_to_ptr.vmem [resolvable:$true] %s395
          %401 = dma.hbm_to_vmem [thread:$0]  %s6, 2048, %s396, [#allocation16], 128, 128, 8
        $region36: #{tpu_custom_call.1} parent=11 // pred_fallthru
          _
        // Predicated region
        $region37: #{tpu_custom_call.1} parent=11 // pred_check
          %p402 = pneg %p203
        $region38: #{tpu_custom_call.1} parent=11 // pred_check_branch
          %404 = sbr.rel (%p402) target = $region40
        $region39: #{tpu_custom_call.1} parent=11 // pred_region
          %s406 = ssub.s32 16, 16
          %407 = vsyncadd [#allocation19], %s406
          %s409 = sshll.u32 [#allocation18], 4
          %s410 = int_to_ptr.vmem [resolvable:$true] %s409
          %412 = dma.hbm_to_vmem [thread:$0]  %s7, 16, %s410, [#allocation19]
        $region40: #{tpu_custom_call.1} parent=11 // pred_fallthru
          _
        // Predicated region
        $region41: #{tpu_custom_call.1} parent=11 // pred_check
          %p413 = pneg %p224
        $region42: #{tpu_custom_call.1} parent=11 // pred_check_branch
          %415 = sbr.rel (%p413) target = $region44
        $region43: #{tpu_custom_call.1} parent=11 // pred_region
          %s417 = ssub.s32 16, 16
          %418 = vsyncadd [#allocation19], %s417
          %s420 = sshll.u32 [#allocation20], 4
          %s421 = int_to_ptr.vmem [resolvable:$true] %s420
          %423 = dma.hbm_to_vmem [thread:$0]  %s8, 16, %s421, [#allocation19]
        $region44: #{tpu_custom_call.1} parent=11 // pred_fallthru
          _
        // Predicated region
        $region45: #{tpu_custom_call.1} parent=11 // pred_check
          %p424 = pneg %p245
        $region46: #{tpu_custom_call.1} parent=11 // pred_check_branch
          %426 = sbr.rel (%p424) target = $region48
        $region47: #{tpu_custom_call.1} parent=11 // pred_region
          %s428 = ssub.s32 16, 16
          %429 = vsyncadd [#allocation22], %s428
          %s431 = sshll.u32 [#allocation21], 4
          %s432 = int_to_ptr.vmem [resolvable:$true] %s431
          %434 = dma.hbm_to_vmem [thread:$0]  %s9, 16, %s432, [#allocation22]
        $region48: #{tpu_custom_call.1} parent=11 // pred_fallthru
          _
        // Predicated region
        $region49: #{tpu_custom_call.1} parent=11 // pred_check
          %p435 = pneg %p266
        $region50: #{tpu_custom_call.1} parent=11 // pred_check_branch
          %437 = sbr.rel (%p435) target = $region52
        $region51: #{tpu_custom_call.1} parent=11 // pred_region
          %s439 = ssub.s32 16, 16
          %440 = vsyncadd [#allocation22], %s439
          %s442 = sshll.u32 [#allocation23], 4
          %s443 = int_to_ptr.vmem [resolvable:$true] %s442
          %445 = dma.hbm_to_vmem [thread:$0]  %s10, 16, %s443, [#allocation22]
        $region52: #{tpu_custom_call.1} parent=11 // pred_fallthru
          _
        // Predicated region
        $region53: #{tpu_custom_call.1} parent=11 // pred_check
          %p446 = pneg %p287
        $region54: #{tpu_custom_call.1} parent=11 // pred_check_branch
          %448 = sbr.rel (%p446) target = $region56
        $region55: #{tpu_custom_call.1} parent=11 // pred_region
          %s450 = ssub.s32 16, 16
          %451 = vsyncadd [#allocation25], %s450
          %s453 = sshll.u32 [#allocation24], 4
          %s454 = int_to_ptr.vmem [resolvable:$true] %s453
          %456 = dma.hbm_to_vmem [thread:$0]  %s11, 16, %s454, [#allocation25]
        $region56: #{tpu_custom_call.1} parent=11 // pred_fallthru
          _
      $region12: #{tpu_custom_call.1} parent=5 // pred_fallthru
        _
      %p457 = scmp.lt.s32.totalorder %s30, 2
      // Predicated region
      $region57: #{tpu_custom_call.1} parent=5 // pred_check
        %p458 = pneg %p457
      $region58: #{tpu_custom_call.1} parent=5 // pred_check_branch
        %460 = sbr.rel (%p458) target = $region60
      $region59: #{tpu_custom_call.1} parent=5 // pred_region
        // Predicated region
        $region61: #{tpu_custom_call.1} parent=59 // pred_check
          %p461 = pneg %p50
        $region62: #{tpu_custom_call.1} parent=59 // pred_check_branch
          %463 = sbr.rel (%p461) target = $region64
        $region63: #{tpu_custom_call.1} parent=59 // pred_region
          %s464 = sand.u32 %s40, 1
          %s465 = scalar_lea.sflag [#allocation7], %s464
          %s466 = sand.u32 %s40, 1
          %s467 = smul.addr %s466, 8
          %s468 = scalar_lea.vmem [#allocation6], %s467
          %s470 = ssub.s32 128, 128
          %471 = vsyncadd %s465, %s470
          %s472 = smul.addr %s30, 128
          %s473 = scalar_lea.hbm %s0, %s472
          %s475 = sshll.u32 %s468, 4
          %s476 = int_to_ptr.vmem [resolvable:$true] %s475
          %478 = dma.hbm_to_vmem [thread:$0]  %s473, 128, %s476, %s465
        $region64: #{tpu_custom_call.1} parent=59 // pred_fallthru
          _
      $region60: #{tpu_custom_call.1} parent=5 // pred_fallthru
        _
      %p479 = scmp.le.s32.totalorder 1, %s30
      %p480 = scmp.lt.s32.totalorder %s30, 3
      %p481 = pnand %p479, %p480
      %p482 = pneg %p481
      // Predicated region
      $region65: #{tpu_custom_call.1} parent=5 // pred_check
        _
      $region66: #{tpu_custom_call.1} parent=5 // pred_check_branch
        %484 = sbr.rel (%p481) target = $region68
      $region67: #{tpu_custom_call.1} parent=5 // pred_region
        %s485 = ssub.s32 %s30, 1
        %s486 = sand.u32 %s43, 1
        %s487 = scalar_lea.sflag [#allocation7], %s486
        %s488 = sand.u32 %s43, 1
        %s489 = smul.addr %s488, 8
        %s490 = scalar_lea.vmem [#allocation6], %s489
        // Predicated region
        $region69: #{tpu_custom_call.1} parent=67 // pred_check
          %p491 = pneg %p56
        $region70: #{tpu_custom_call.1} parent=67 // pred_check_branch
          %493 = sbr.rel (%p491) target = $region72
        $region71: #{tpu_custom_call.1} parent=67 // pred_region
          %494 = dma.done %s487, 128
        $region72: #{tpu_custom_call.1} parent=67 // pred_fallthru
          _
        // Predicated region
        $region73: #{tpu_custom_call.1} parent=67 // pred_check
          %p495 = pneg %p77
        $region74: #{tpu_custom_call.1} parent=67 // pred_check_branch
          %497 = sbr.rel (%p495) target = $region76
        $region75: #{tpu_custom_call.1} parent=67 // pred_region
          %498 = dma.done [#allocation10], 512
        $region76: #{tpu_custom_call.1} parent=67 // pred_fallthru
          _
        // Predicated region
        $region77: #{tpu_custom_call.1} parent=67 // pred_check
          %p499 = pneg %p98
        $region78: #{tpu_custom_call.1} parent=67 // pred_check_branch
          %501 = sbr.rel (%p499) target = $region80
        $region79: #{tpu_custom_call.1} parent=67 // pred_region
          %502 = dma.done [#allocation10], 512
        $region80: #{tpu_custom_call.1} parent=67 // pred_fallthru
          _
        // Predicated region
        $region81: #{tpu_custom_call.1} parent=67 // pred_check
          %p503 = pneg %p119
        $region82: #{tpu_custom_call.1} parent=67 // pred_check_branch
          %505 = sbr.rel (%p503) target = $region84
        $region83: #{tpu_custom_call.1} parent=67 // pred_region
          %506 = dma.done [#allocation13], 16
        $region84: #{tpu_custom_call.1} parent=67 // pred_fallthru
          _
        // Predicated region
        $region85: #{tpu_custom_call.1} parent=67 // pred_check
          %p507 = pneg %p140
        $region86: #{tpu_custom_call.1} parent=67 // pred_check_branch
          %509 = sbr.rel (%p507) target = $region88
        $region87: #{tpu_custom_call.1} parent=67 // pred_region
          %510 = dma.done [#allocation13], 512
        $region88: #{tpu_custom_call.1} parent=67 // pred_fallthru
          _
        // Predicated region
        $region89: #{tpu_custom_call.1} parent=67 // pred_check
          %p511 = pneg %p161
        $region90: #{tpu_custom_call.1} parent=67 // pred_check_branch
          %513 = sbr.rel (%p511) target = $region92
        $region91: #{tpu_custom_call.1} parent=67 // pred_region
          %514 = dma.done [#allocation16], 16
        $region92: #{tpu_custom_call.1} parent=67 // pred_fallthru
          _
        // Predicated region
        $region93: #{tpu_custom_call.1} parent=67 // pred_check
          %p515 = pneg %p182
        $region94: #{tpu_custom_call.1} parent=67 // pred_check_branch
          %517 = sbr.rel (%p515) target = $region96
        $region95: #{tpu_custom_call.1} parent=67 // pred_region
          %518 = dma.done [#allocation16], 2048
        $region96: #{tpu_custom_call.1} parent=67 // pred_fallthru
          _
        // Predicated region
        $region97: #{tpu_custom_call.1} parent=67 // pred_check
          %p519 = pneg %p203
        $region98: #{tpu_custom_call.1} parent=67 // pred_check_branch
          %521 = sbr.rel (%p519) target = $region100
        $region99: #{tpu_custom_call.1} parent=67 // pred_region
          %522 = dma.done [#allocation19], 16
        $region100: #{tpu_custom_call.1} parent=67 // pred_fallthru
          _
        // Predicated region
        $region101: #{tpu_custom_call.1} parent=67 // pred_check
          %p523 = pneg %p224
        $region102: #{tpu_custom_call.1} parent=67 // pred_check_branch
          %525 = sbr.rel (%p523) target = $region104
        $region103: #{tpu_custom_call.1} parent=67 // pred_region
          %526 = dma.done [#allocation19], 16
        $region104: #{tpu_custom_call.1} parent=67 // pred_fallthru
          _
        // Predicated region
        $region105: #{tpu_custom_call.1} parent=67 // pred_check
          %p527 = pneg %p245
        $region106: #{tpu_custom_call.1} parent=67 // pred_check_branch
          %529 = sbr.rel (%p527) target = $region108
        $region107: #{tpu_custom_call.1} parent=67 // pred_region
          %530 = dma.done [#allocation22], 16
        $region108: #{tpu_custom_call.1} parent=67 // pred_fallthru
          _
        // Predicated region
        $region109: #{tpu_custom_call.1} parent=67 // pred_check
          %p531 = pneg %p266
        $region110: #{tpu_custom_call.1} parent=67 // pred_check_branch
          %533 = sbr.rel (%p531) target = $region112
        $region111: #{tpu_custom_call.1} parent=67 // pred_region
          %534 = dma.done [#allocation22], 16
        $region112: #{tpu_custom_call.1} parent=67 // pred_fallthru
          _
        // Predicated region
        $region113: #{tpu_custom_call.1} parent=67 // pred_check
          %p535 = pneg %p287
        $region114: #{tpu_custom_call.1} parent=67 // pred_check_branch
          %537 = sbr.rel (%p535) target = $region116
        $region115: #{tpu_custom_call.1} parent=67 // pred_region
          %538 = dma.done [#allocation25], 16
        $region116: #{tpu_custom_call.1} parent=67 // pred_fallthru
          _
        %s539 = sand.u32 %s43, 1
        %s540 = scalar_lea.sflag [#allocation7], %s539
        %s541 = sand.u32 %s43, 1
        %s542 = smul.addr %s541, 8
        %s543 = scalar_lea.vmem [#allocation6], %s542
        %p544 = pneg %p56
        %p545 = pneg %p53
        %p546 = pneg %p77
        %p547 = pneg %p74
        %p548 = pneg %p98
        %p549 = pneg %p95
        %p550 = pneg %p119
        %p551 = pneg %p116
        %p552 = pneg %p140
        %p553 = pneg %p137
        %p554 = pneg %p161
        %p555 = pneg %p158
        %p556 = pneg %p182
        %p557 = pneg %p179
        %p558 = pneg %p203
        %p559 = pneg %p200
        %p560 = pneg %p224
        %p561 = pneg %p221
        %p562 = pneg %p245
        %p563 = pneg %p242
        %p564 = pneg %p266
        %p565 = pneg %p263
        %p566 = pneg %p287
        %p567 = pneg %p284
        %p568 = pneg %p313
        %p569 = pneg %p310
        %s570 = sand.u32 %s300, 1
        %s571 = scalar_lea.sflag [#allocation8], %s570
        %s572 = sand.u32 %s300, 1
        %s573 = smul.addr %s572, 8
        %s574 = scalar_lea.vmem [#allocation26], %s573
        %v575 = vld [vmem:[%s490] sm:$0xff]
        %v576 = vld [vmem:[#allocation20] sm:$0x1]
        %v577 = vld [vmem:[#allocation21] sm:$0x1]
        %vm578 = vcmask 261120
        %v579 = vsel %vm578, %v575, 0.0
        %580 = vadd.xlane.f32.xlu0 %v579
        %v581 = vpop.xlane.xlu0 %580
        %v582 = vrcp.pop 32.0
        %v583 = vmul.f32 %v581, %v582
        %v584 = vsub.f32 %v575, %v583
        %v585 = vmul.f32 %v584, %v584
        %v586 = vsel %vm578, %v585, 0.0
        %587 = vadd.xlane.f32.xlu0 %v586
        %v588 = vpop.xlane.xlu0 %587
        %v589 = vmul.f32 %v588, %v582
        %v590 = vadd.f32 %v589, 1e-05
        %v591 = vrsqrt.pop %v590
        %v592 = vmul.f32 %v584, %v591
        %v594 = vlaneseq
        %v595 = vshrl.u32 %v594, 7
        %v596 = vsub.s32 0, %v595
        %v597 = vrot.slane %v576, %v596
        %v599 = vmul.f32 %v592, %v597
        %v601 = vlaneseq
        %v602 = vshrl.u32 %v601, 7
        %v603 = vsub.s32 0, %v602
        %v604 = vrot.slane %v577, %v603
        %v606 = vadd.f32 %v599, %v604
        %v607 = vld [vmem:[#allocation9] sm:$0xff]
        %v608 = vld [vmem:[#allocation9 + $0x8] sm:$0xff]
        %v609 = vld [vmem:[#allocation9 + $0x10] sm:$0xff]
        %v610 = vld [vmem:[#allocation9 + $0x18] sm:$0xff]
        %v612 = vsel %vm578, %v606, 0
        %614 = vmatprep.subr.mxu0 0.0
        %615 = vmatpush1.msra.mxu0 %v607
        %616 = vmatprep.subr.mxu0 0.0
        %617 = vmatpush1.msra.mxu0 %v608
        %618 = vmatprep.subr.mxu0 0.0
        %619 = vmatpush1.msra.mxu0 %v609
        %620 = vmatprep.subr.mxu0 0.0
        %621 = vmatpush1.msra.mxu0 %v610
        %622 = vmatprep.subr.mxu0 0.0
        %623 = vmatpush1.msra.mxu0 0.0
        %624 = vmatprep.subr.mxu0 0.0
        %625 = vmatpush1.msra.mxu0 0.0
        %626 = vmatprep.subr.mxu0 0.0
        %627 = vmatpush1.msra.mxu0 0.0
        %628 = vmatprep.subr.mxu0 0.0
        %629 = vmatpush1.msra.mxu0 0.0
        %630 = vmatprep.subr.mxu0 0.0
        %631 = vmatpush1.msra.mxu0 0.0
        %632 = vmatprep.subr.mxu0 0.0
        %633 = vmatpush1.msra.mxu0 0.0
        %634 = vmatprep.subr.mxu0 0.0
        %635 = vmatpush1.msra.mxu0 0.0
        %636 = vmatprep.subr.mxu0 0.0
        %637 = vmatpush1.msra.mxu0 0.0
        %638 = vmatprep.subr.mxu0 0.0
        %639 = vmatpush1.msra.mxu0 0.0
        %640 = vmatprep.subr.mxu0 0.0
        %641 = vmatpush1.msra.mxu0 0.0
        %642 = vmatprep.subr.mxu0 0.0
        %643 = vmatpush1.msra.mxu0 0.0
        %644 = vmatprep.subr.mxu0 0.0
        %645 = vmatpush1.msra.mxu0 0.0
        %646 = vmatprep.subr.mxu0 0.0
        %647 = vmatpush1.msra.mxu0 0.0
        %648 = vmatprep.subr.mxu0 0.0
        %649 = vmatpush1.msra.mxu0 0.0
        %650 = vmatprep.subr.mxu0 0.0
        %651 = vmatpush1.msra.mxu0 0.0
        %652 = vmatprep.subr.mxu0 0.0
        %653 = vmatpush1.msra.mxu0 0.0
        %654 = vmatprep.subr.mxu0 0.0
        %655 = vmatpush1.msra.mxu0 0.0
        %656 = vmatprep.subr.mxu0 0.0
        %657 = vmatpush1.msra.mxu0 0.0
        %658 = vmatprep.subr.mxu0 0.0
        %659 = vmatpush1.msra.mxu0 0.0
        %660 = vmatprep.subr.mxu0 0.0
        %661 = vmatpush1.msra.mxu0 0.0
        %662 = vmatprep.subr.mxu0 0.0
        %663 = vmatpush1.msra.mxu0 0.0
        %664 = vmatprep.subr.mxu0 0.0
        %665 = vmatpush1.msra.mxu0 0.0
        %666 = vmatprep.subr.mxu0 0.0
        %667 = vmatpush1.msra.mxu0 0.0
        %668 = vmatprep.subr.mxu0 0.0
        %669 = vmatpush1.msra.mxu0 0.0
        %670 = vmatprep.subr.mxu0 0.0
        %671 = vmatpush1.msra.mxu0 0.0
        %672 = vmatprep.subr.mxu0 0.0
        %673 = vmatpush1.msra.mxu0 0.0
        %674 = vmatprep.subr.mxu0 0.0
        %675 = vmatpush1.msra.mxu0 0.0
        %676 = vmatprep.subr.mxu0 0.0
        %677 = vmatpush1.msra.mxu0 0.0
        %678 = vmatprep.mubr.f32.mxu0 0.0
        %679 = vmatmul.mubr.f32.gmra.mrb[0].mxu0 %v612
        %v680 = vpop.f32.mrb[0].mxu0
        %v681 = vadd.f32 0.0, %v680
        %v682 = vpop.f32.mrb[0].mxu0
        %683 = vdwg.mxu0
        %v684 = vmul.f32 %v681, 0.17677669
        %vm685 = vcmask 64512
        %686 = vst.msk [vmem:[#allocation2] sm:$0xff] %vm685, %v684
        %688 = vrot.lane.b32.xlu0 %v681, 96
        %v689 = vpop.permute.xlu0 %688
        %691 = vst.msk [vmem:[#allocation3] sm:$0xff] %vm685, %v689
        %692 = vrot.lane.b32.xlu0 %v681, 64
        %v693 = vpop.permute.xlu0 %692
        %695 = vst.msk [vmem:[#allocation4] sm:$0xff] %vm685, %v693
        %697 = vrot.lane.b32.xlu0 %v684, 120
        %v698 = vpop.permute.xlu0 %697
        %s700 = scalar_lea.vmem [#allocation2], 8
        %701 = vst.msk [vmem:[%s700] sm:$0xff] %vm685, %v698
        %702 = vrot.lane.b32.xlu0 %v681, 88
        %v703 = vpop.permute.xlu0 %702
        %s705 = scalar_lea.vmem [#allocation3], 8
        %706 = vst.msk [vmem:[%s705] sm:$0xff] %vm685, %v703
        %707 = vrot.lane.b32.xlu0 %v681, 56
        %v708 = vpop.permute.xlu0 %707
        %s710 = scalar_lea.vmem [#allocation4], 8
        %711 = vst.msk [vmem:[%s710] sm:$0xff] %vm685, %v708
        %712 = vrot.lane.b32.xlu0 %v684, 112
        %v713 = vpop.permute.xlu0 %712
        %s715 = scalar_lea.vmem [#allocation2], 16
        %716 = vst.msk [vmem:[%s715] sm:$0xff] %vm685, %v713
        %717 = vrot.lane.b32.xlu0 %v681, 80
        %v718 = vpop.permute.xlu0 %717
        %s720 = scalar_lea.vmem [#allocation3], 16
        %721 = vst.msk [vmem:[%s720] sm:$0xff] %vm685, %v718
        %722 = vrot.lane.b32.xlu0 %v681, 48
        %v723 = vpop.permute.xlu0 %722
        %s725 = scalar_lea.vmem [#allocation4], 16
        %726 = vst.msk [vmem:[%s725] sm:$0xff] %vm685, %v723
        %727 = vrot.lane.b32.xlu0 %v684, 104
        %v728 = vpop.permute.xlu0 %727
        %s730 = scalar_lea.vmem [#allocation2], 24
        %731 = vst.msk [vmem:[%s730] sm:$0xff] %vm685, %v728
        %732 = vrot.lane.b32.xlu0 %v681, 72
        %v733 = vpop.permute.xlu0 %732
        %s735 = scalar_lea.vmem [#allocation3], 24
        %736 = vst.msk [vmem:[%s735] sm:$0xff] %vm685, %v733
        %737 = vrot.lane.b32.xlu0 %v681, 40
        %v738 = vpop.permute.xlu0 %737
        %s740 = scalar_lea.vmem [#allocation4], 24
        %741 = vst.msk [vmem:[%s740] sm:$0xff] %vm685, %v738
        %v742 = vld [vmem:[#allocation2] sm:$0xff]
        %v743 = vld [vmem:[#allocation2 + $0x8] sm:$0xff]
        %v744 = vld [vmem:[#allocation2 + $0x10] sm:$0xff]
        %v745 = vld [vmem:[#allocation2 + $0x18] sm:$0xff]
        %v746 = vld [vmem:[#allocation3] sm:$0xff]
        %v747 = vld [vmem:[#allocation3 + $0x8] sm:$0xff]
        %v748 = vld [vmem:[#allocation3 + $0x10] sm:$0xff]
        %v749 = vld [vmem:[#allocation3 + $0x18] sm:$0xff]
        %v750 = vld [vmem:[#allocation4] sm:$0xff]
        %v751 = vld [vmem:[#allocation4 + $0x8] sm:$0xff]
        %v752 = vld [vmem:[#allocation4 + $0x10] sm:$0xff]
        %v753 = vld [vmem:[#allocation4 + $0x18] sm:$0xff]
        %v754 = vlaneseq
        %v755 = vshrl.u32 %v754, 7
        %v756 = vlaneseq
        %v757 = vand.u32 %v756, 127
        %vm758 = vcmp.le.s32.totalorder %v757, %v755
        %v760 = vsel %vm685, %v742, 0
        %v763 = vsel %vm685, %v746, 0
        %765 = vmatprep.subr.mxu0 0.0
        %766 = vmatpush1.xpose.msra.mxu0 %v763
        %767 = vmatprep.subr.mxu0 0.0
        %768 = vmatpush1.xpose.msra.mxu0 0.0
        %769 = vmatprep.subr.mxu0 0.0
        %770 = vmatpush1.xpose.msra.mxu0 0.0
        %771 = vmatprep.subr.mxu0 0.0
        %772 = vmatpush1.xpose.msra.mxu0 0.0
        %773 = vmatprep.subr.mxu0 0.0
        %774 = vmatpush1.xpose.msra.mxu0 0.0
        %775 = vmatprep.subr.mxu0 0.0
        %776 = vmatpush1.xpose.msra.mxu0 0.0
        %777 = vmatprep.subr.mxu0 0.0
        %778 = vmatpush1.xpose.msra.mxu0 0.0
        %779 = vmatprep.subr.mxu0 0.0
        %780 = vmatpush1.xpose.msra.mxu0 0.0
        %781 = vmatprep.subr.mxu0 0.0
        %782 = vmatpush1.xpose.msra.mxu0 0.0
        %783 = vmatprep.subr.mxu0 0.0
        %784 = vmatpush1.xpose.msra.mxu0 0.0
        %785 = vmatprep.subr.mxu0 0.0
        %786 = vmatpush1.xpose.msra.mxu0 0.0
        %787 = vmatprep.subr.mxu0 0.0
        %788 = vmatpush1.xpose.msra.mxu0 0.0
        %789 = vmatprep.subr.mxu0 0.0
        %790 = vmatpush1.xpose.msra.mxu0 0.0
        %791 = vmatprep.subr.mxu0 0.0
        %792 = vmatpush1.xpose.msra.mxu0 0.0
        %793 = vmatprep.subr.mxu0 0.0
        %794 = vmatpush1.xpose.msra.mxu0 0.0
        %795 = vmatprep.subr.mxu0 0.0
        %796 = vmatpush1.xpose.msra.mxu0 0.0
        %797 = vmatprep.subr.mxu0 0.0
        %798 = vmatpush1.xpose.msra.mxu0 0.0
        %799 = vmatprep.subr.mxu0 0.0
        %800 = vmatpush1.xpose.msra.mxu0 0.0
        %801 = vmatprep.subr.mxu0 0.0
        %802 = vmatpush1.xpose.msra.mxu0 0.0
        %803 = vmatprep.subr.mxu0 0.0
        %804 = vmatpush1.xpose.msra.mxu0 0.0
        %805 = vmatprep.subr.mxu0 0.0
        %806 = vmatpush1.xpose.msra.mxu0 0.0
        %807 = vmatprep.subr.mxu0 0.0
        %808 = vmatpush1.xpose.msra.mxu0 0.0
        %809 = vmatprep.subr.mxu0 0.0
        %810 = vmatpush1.xpose.msra.mxu0 0.0
        %811 = vmatprep.subr.mxu0 0.0
        %812 = vmatpush1.xpose.msra.mxu0 0.0
        %813 = vmatprep.subr.mxu0 0.0
        %814 = vmatpush1.xpose.msra.mxu0 0.0
        %815 = vmatprep.subr.mxu0 0.0
        %816 = vmatpush1.xpose.msra.mxu0 0.0
        %817 = vmatprep.subr.mxu0 0.0
        %818 = vmatpush1.xpose.msra.mxu0 0.0
        %819 = vmatprep.subr.mxu0 0.0
        %820 = vmatpush1.xpose.msra.mxu0 0.0
        %821 = vmatprep.subr.mxu0 0.0
        %822 = vmatpush1.xpose.msra.mxu0 0.0
        %823 = vmatprep.subr.mxu0 0.0
        %824 = vmatpush1.xpose.msra.mxu0 0.0
        %825 = vmatprep.subr.mxu0 0.0
        %826 = vmatpush1.xpose.msra.mxu0 0.0
        %827 = vmatprep.subr.mxu0 0.0
        %828 = vmatpush1.xpose.msra.mxu0 0.0
        %829 = vmatprep.mubr.f32.mxu0 0.0
        %830 = vmatmul.mubr.f32.gmra.mrb[0].mxu0 %v760
        %v831 = vpop.f32.mrb[0].mxu0
        %v832 = vadd.f32 0.0, %v831
        %v833 = vpop.f32.mrb[0].mxu0
        %834 = vdwg.mxu0
        %v836 = vsel %vm685, %v743, 0
        %v839 = vsel %vm685, %v747, 0
        %841 = vmatprep.subr.mxu0 0.0
        %842 = vmatpush1.xpose.msra.mxu0 %v839
        %843 = vmatprep.subr.mxu0 0.0
        %844 = vmatpush1.xpose.msra.mxu0 0.0
        %845 = vmatprep.subr.mxu0 0.0
        %846 = vmatpush1.xpose.msra.mxu0 0.0
        %847 = vmatprep.subr.mxu0 0.0
        %848 = vmatpush1.xpose.msra.mxu0 0.0
        %849 = vmatprep.subr.mxu0 0.0
        %850 = vmatpush1.xpose.msra.mxu0 0.0
        %851 = vmatprep.subr.mxu0 0.0
        %852 = vmatpush1.xpose.msra.mxu0 0.0
        %853 = vmatprep.subr.mxu0 0.0
        %854 = vmatpush1.xpose.msra.mxu0 0.0
        %855 = vmatprep.subr.mxu0 0.0
        %856 = vmatpush1.xpose.msra.mxu0 0.0
        %857 = vmatprep.subr.mxu0 0.0
        %858 = vmatpush1.xpose.msra.mxu0 0.0
        %859 = vmatprep.subr.mxu0 0.0
        %860 = vmatpush1.xpose.msra.mxu0 0.0
        %861 = vmatprep.subr.mxu0 0.0
        %862 = vmatpush1.xpose.msra.mxu0 0.0
        %863 = vmatprep.subr.mxu0 0.0
        %864 = vmatpush1.xpose.msra.mxu0 0.0
        %865 = vmatprep.subr.mxu0 0.0
        %866 = vmatpush1.xpose.msra.mxu0 0.0
        %867 = vmatprep.subr.mxu0 0.0
        %868 = vmatpush1.xpose.msra.mxu0 0.0
        %869 = vmatprep.subr.mxu0 0.0
        %870 = vmatpush1.xpose.msra.mxu0 0.0
        %871 = vmatprep.subr.mxu0 0.0
        %872 = vmatpush1.xpose.msra.mxu0 0.0
        %873 = vmatprep.subr.mxu0 0.0
        %874 = vmatpush1.xpose.msra.mxu0 0.0
        %875 = vmatprep.subr.mxu0 0.0
        %876 = vmatpush1.xpose.msra.mxu0 0.0
        %877 = vmatprep.subr.mxu0 0.0
        %878 = vmatpush1.xpose.msra.mxu0 0.0
        %879 = vmatprep.subr.mxu0 0.0
        %880 = vmatpush1.xpose.msra.mxu0 0.0
        %881 = vmatprep.subr.mxu0 0.0
        %882 = vmatpush1.xpose.msra.mxu0 0.0
        %883 = vmatprep.subr.mxu0 0.0
        %884 = vmatpush1.xpose.msra.mxu0 0.0
        %885 = vmatprep.subr.mxu0 0.0
        %886 = vmatpush1.xpose.msra.mxu0 0.0
        %887 = vmatprep.subr.mxu0 0.0
        %888 = vmatpush1.xpose.msra.mxu0 0.0
        %889 = vmatprep.subr.mxu0 0.0
        %890 = vmatpush1.xpose.msra.mxu0 0.0
        %891 = vmatprep.subr.mxu0 0.0
        %892 = vmatpush1.xpose.msra.mxu0 0.0
        %893 = vmatprep.subr.mxu0 0.0
        %894 = vmatpush1.xpose.msra.mxu0 0.0
        %895 = vmatprep.subr.mxu0 0.0
        %896 = vmatpush1.xpose.msra.mxu0 0.0
        %897 = vmatprep.subr.mxu0 0.0
        %898 = vmatpush1.xpose.msra.mxu0 0.0
        %899 = vmatprep.subr.mxu0 0.0
        %900 = vmatpush1.xpose.msra.mxu0 0.0
        %901 = vmatprep.subr.mxu0 0.0
        %902 = vmatpush1.xpose.msra.mxu0 0.0
        %903 = vmatprep.subr.mxu0 0.0
        %904 = vmatpush1.xpose.msra.mxu0 0.0
        %905 = vmatprep.mubr.f32.mxu0 0.0
        %906 = vmatmul.mubr.f32.gmra.mrb[0].mxu0 %v836
        %v907 = vpop.f32.mrb[0].mxu0
        %v908 = vadd.f32 0.0, %v907
        %v909 = vpop.f32.mrb[0].mxu0
        %910 = vdwg.mxu0
        %v912 = vsel %vm685, %v744, 0
        %v915 = vsel %vm685, %v748, 0
        %917 = vmatprep.subr.mxu0 0.0
        %918 = vmatpush1.xpose.msra.mxu0 %v915
        %919 = vmatprep.subr.mxu0 0.0
        %920 = vmatpush1.xpose.msra.mxu0 0.0
        %921 = vmatprep.subr.mxu0 0.0
        %922 = vmatpush1.xpose.msra.mxu0 0.0
        %923 = vmatprep.subr.mxu0 0.0
        %924 = vmatpush1.xpose.msra.mxu0 0.0
        %925 = vmatprep.subr.mxu0 0.0
        %926 = vmatpush1.xpose.msra.mxu0 0.0
        %927 = vmatprep.subr.mxu0 0.0
        %928 = vmatpush1.xpose.msra.mxu0 0.0
        %929 = vmatprep.subr.mxu0 0.0
        %930 = vmatpush1.xpose.msra.mxu0 0.0
        %931 = vmatprep.subr.mxu0 0.0
        %932 = vmatpush1.xpose.msra.mxu0 0.0
        %933 = vmatprep.subr.mxu0 0.0
        %934 = vmatpush1.xpose.msra.mxu0 0.0
        %935 = vmatprep.subr.mxu0 0.0
        %936 = vmatpush1.xpose.msra.mxu0 0.0
        %937 = vmatprep.subr.mxu0 0.0
        %938 = vmatpush1.xpose.msra.mxu0 0.0
        %939 = vmatprep.subr.mxu0 0.0
        %940 = vmatpush1.xpose.msra.mxu0 0.0
        %941 = vmatprep.subr.mxu0 0.0
        %942 = vmatpush1.xpose.msra.mxu0 0.0
        %943 = vmatprep.subr.mxu0 0.0
        %944 = vmatpush1.xpose.msra.mxu0 0.0
        %945 = vmatprep.subr.mxu0 0.0
        %946 = vmatpush1.xpose.msra.mxu0 0.0
        %947 = vmatprep.subr.mxu0 0.0
        %948 = vmatpush1.xpose.msra.mxu0 0.0
        %949 = vmatprep.subr.mxu0 0.0
        %950 = vmatpush1.xpose.msra.mxu0 0.0
        %951 = vmatprep.subr.mxu0 0.0
        %952 = vmatpush1.xpose.msra.mxu0 0.0
        %953 = vmatprep.subr.mxu0 0.0
        %954 = vmatpush1.xpose.msra.mxu0 0.0
        %955 = vmatprep.subr.mxu0 0.0
        %956 = vmatpush1.xpose.msra.mxu0 0.0
        %957 = vmatprep.subr.mxu0 0.0
        %958 = vmatpush1.xpose.msra.mxu0 0.0
        %959 = vmatprep.subr.mxu0 0.0
        %960 = vmatpush1.xpose.msra.mxu0 0.0
        %961 = vmatprep.subr.mxu0 0.0
        %962 = vmatpush1.xpose.msra.mxu0 0.0
        %963 = vmatprep.subr.mxu0 0.0
        %964 = vmatpush1.xpose.msra.mxu0 0.0
        %965 = vmatprep.subr.mxu0 0.0
        %966 = vmatpush1.xpose.msra.mxu0 0.0
        %967 = vmatprep.subr.mxu0 0.0
        %968 = vmatpush1.xpose.msra.mxu0 0.0
        %969 = vmatprep.subr.mxu0 0.0
        %970 = vmatpush1.xpose.msra.mxu0 0.0
        %971 = vmatprep.subr.mxu0 0.0
        %972 = vmatpush1.xpose.msra.mxu0 0.0
        %973 = vmatprep.subr.mxu0 0.0
        %974 = vmatpush1.xpose.msra.mxu0 0.0
        %975 = vmatprep.subr.mxu0 0.0
        %976 = vmatpush1.xpose.msra.mxu0 0.0
        %977 = vmatprep.subr.mxu0 0.0
        %978 = vmatpush1.xpose.msra.mxu0 0.0
        %979 = vmatprep.subr.mxu0 0.0
        %980 = vmatpush1.xpose.msra.mxu0 0.0
        %981 = vmatprep.mubr.f32.mxu0 0.0
        %982 = vmatmul.mubr.f32.gmra.mrb[0].mxu0 %v912
        %v983 = vpop.f32.mrb[0].mxu0
        %v984 = vadd.f32 0.0, %v983
        %v985 = vpop.f32.mrb[0].mxu0
        %986 = vdwg.mxu0
        %v988 = vsel %vm685, %v745, 0
        %v991 = vsel %vm685, %v749, 0
        %993 = vmatprep.subr.mxu0 0.0
        %994 = vmatpush1.xpose.msra.mxu0 %v991
        %995 = vmatprep.subr.mxu0 0.0
        %996 = vmatpush1.xpose.msra.mxu0 0.0
        %997 = vmatprep.subr.mxu0 0.0
        %998 = vmatpush1.xpose.msra.mxu0 0.0
        %999 = vmatprep.subr.mxu0 0.0
        %1000 = vmatpush1.xpose.msra.mxu0 0.0
        %1001 = vmatprep.subr.mxu0 0.0
        %1002 = vmatpush1.xpose.msra.mxu0 0.0
        %1003 = vmatprep.subr.mxu0 0.0
        %1004 = vmatpush1.xpose.msra.mxu0 0.0
        %1005 = vmatprep.subr.mxu0 0.0
        %1006 = vmatpush1.xpose.msra.mxu0 0.0
        %1007 = vmatprep.subr.mxu0 0.0
        %1008 = vmatpush1.xpose.msra.mxu0 0.0
        %1009 = vmatprep.subr.mxu0 0.0
        %1010 = vmatpush1.xpose.msra.mxu0 0.0
        %1011 = vmatprep.subr.mxu0 0.0
        %1012 = vmatpush1.xpose.msra.mxu0 0.0
        %1013 = vmatprep.subr.mxu0 0.0
        %1014 = vmatpush1.xpose.msra.mxu0 0.0
        %1015 = vmatprep.subr.mxu0 0.0
        %1016 = vmatpush1.xpose.msra.mxu0 0.0
        %1017 = vmatprep.subr.mxu0 0.0
        %1018 = vmatpush1.xpose.msra.mxu0 0.0
        %1019 = vmatprep.subr.mxu0 0.0
        %1020 = vmatpush1.xpose.msra.mxu0 0.0
        %1021 = vmatprep.subr.mxu0 0.0
        %1022 = vmatpush1.xpose.msra.mxu0 0.0
        %1023 = vmatprep.subr.mxu0 0.0
        %1024 = vmatpush1.xpose.msra.mxu0 0.0
        %1025 = vmatprep.subr.mxu0 0.0
        %1026 = vmatpush1.xpose.msra.mxu0 0.0
        %1027 = vmatprep.subr.mxu0 0.0
        %1028 = vmatpush1.xpose.msra.mxu0 0.0
        %1029 = vmatprep.subr.mxu0 0.0
        %1030 = vmatpush1.xpose.msra.mxu0 0.0
        %1031 = vmatprep.subr.mxu0 0.0
        %1032 = vmatpush1.xpose.msra.mxu0 0.0
        %1033 = vmatprep.subr.mxu0 0.0
        %1034 = vmatpush1.xpose.msra.mxu0 0.0
        %1035 = vmatprep.subr.mxu0 0.0
        %1036 = vmatpush1.xpose.msra.mxu0 0.0
        %1037 = vmatprep.subr.mxu0 0.0
        %1038 = vmatpush1.xpose.msra.mxu0 0.0
        %1039 = vmatprep.subr.mxu0 0.0
        %1040 = vmatpush1.xpose.msra.mxu0 0.0
        %1041 = vmatprep.subr.mxu0 0.0
        %1042 = vmatpush1.xpose.msra.mxu0 0.0
        %1043 = vmatprep.subr.mxu0 0.0
        %1044 = vmatpush1.xpose.msra.mxu0 0.0
        %1045 = vmatprep.subr.mxu0 0.0
        %1046 = vmatpush1.xpose.msra.mxu0 0.0
        %1047 = vmatprep.subr.mxu0 0.0
        %1048 = vmatpush1.xpose.msra.mxu0 0.0
        %1049 = vmatprep.subr.mxu0 0.0
        %1050 = vmatpush1.xpose.msra.mxu0 0.0
        %1051 = vmatprep.subr.mxu0 0.0
        %1052 = vmatpush1.xpose.msra.mxu0 0.0
        %1053 = vmatprep.subr.mxu0 0.0
        %1054 = vmatpush1.xpose.msra.mxu0 0.0
        %1055 = vmatprep.subr.mxu0 0.0
        %1056 = vmatpush1.xpose.msra.mxu0 0.0
        %1057 = vmatprep.mubr.f32.mxu0 0.0
        %1058 = vmatmul.mubr.f32.gmra.mrb[0].mxu0 %v988
        %v1059 = vpop.f32.mrb[0].mxu0
        %v1060 = vadd.f32 0.0, %v1059
        %v1061 = vpop.f32.mrb[0].mxu0
        %1062 = vdwg.mxu0
        %v1063 = vsel %vm758, 1, 0
        %vm1064 = vcmp.eq.s32.totalorder %v1063, 1
        %v1065 = vsel %vm1064, %v832, -1e+30
        %v1066 = vsel %vm1064, %v908, -1e+30
        %v1067 = vsel %vm1064, %v984, -1e+30
        %v1068 = vsel %vm1064, %v1060, -1e+30
        %v1069 = vsel %vm685, %v1065, -inf
        %1070 = vmax.xlane.f32.xlu0 %v1069
        %v1071 = vpop.xlane.xlu0 %1070
        %v1072 = vsel %vm685, %v1066, -inf
        %1073 = vmax.xlane.f32.xlu0 %v1072
        %v1074 = vpop.xlane.xlu0 %1073
        %v1075 = vsel %vm685, %v1067, -inf
        %1076 = vmax.xlane.f32.xlu0 %v1075
        %v1077 = vpop.xlane.xlu0 %1076
        %v1078 = vsel %vm685, %v1068, -inf
        %1079 = vmax.xlane.f32.xlu0 %v1078
        %v1080 = vpop.xlane.xlu0 %1079
        %v1081 = vsub.f32 %v1065, %v1071
        %v1082 = vsub.f32 %v1066, %v1074
        %v1083 = vsub.f32 %v1067, %v1077
        %v1084 = vsub.f32 %v1068, %v1080
        %v1085 = vmul.f32 %v1081, 1.442695
        %v1086 = vpow.pop %v1085
        %v1087 = vmul.f32 %v1082, 1.442695
        %v1088 = vpow.pop %v1087
        %v1089 = vmul.f32 %v1083, 1.442695
        %v1090 = vpow.pop %v1089
        %v1091 = vmul.f32 %v1084, 1.442695
        %v1092 = vpow.pop %v1091
        %v1093 = vsel %vm685, %v1086, 0.0
        %1094 = vadd.xlane.f32.xlu0 %v1093
        %v1095 = vpop.xlane.xlu0 %1094
        %v1096 = vsel %vm685, %v1088, 0.0
        %1097 = vadd.xlane.f32.xlu0 %v1096
        %v1098 = vpop.xlane.xlu0 %1097
        %v1099 = vsel %vm685, %v1090, 0.0
        %1100 = vadd.xlane.f32.xlu0 %v1099
        %v1101 = vpop.xlane.xlu0 %1100
        %v1102 = vsel %vm685, %v1092, 0.0
        %1103 = vadd.xlane.f32.xlu0 %v1102
        %v1104 = vpop.xlane.xlu0 %1103
        %v1105 = vrcp.pop %v1095
        %v1106 = vrcp.pop %v1098
        %v1107 = vrcp.pop %v1101
        %v1108 = vrcp.pop %v1104
        %v1109 = vmul.f32 %v1086, %v1105
        %v1110 = vmul.f32 %v1088, %v1106
        %v1111 = vmul.f32 %v1090, %v1107
        %v1112 = vmul.f32 %v1092, %v1108
        %v1114 = vsel %vm685, %v1109, 0
        %1116 = vmatprep.subr.mxu0 0.0
        %1117 = vmatpush1.msra.mxu0 %v750
        %1118 = vmatprep.subr.mxu0 0.0
        %1119 = vmatpush1.msra.mxu0 0.0
        %1120 = vmatprep.subr.mxu0 0.0
        %1121 = vmatpush1.msra.mxu0 0.0
        %1122 = vmatprep.subr.mxu0 0.0
        %1123 = vmatpush1.msra.mxu0 0.0
        %1124 = vmatprep.subr.mxu0 0.0
        %1125 = vmatpush1.msra.mxu0 0.0
        %1126 = vmatprep.subr.mxu0 0.0
        %1127 = vmatpush1.msra.mxu0 0.0
        %1128 = vmatprep.subr.mxu0 0.0
        %1129 = vmatpush1.msra.mxu0 0.0
        %1130 = vmatprep.subr.mxu0 0.0
        %1131 = vmatpush1.msra.mxu0 0.0
        %1132 = vmatprep.subr.mxu0 0.0
        %1133 = vmatpush1.msra.mxu0 0.0
        %1134 = vmatprep.subr.mxu0 0.0
        %1135 = vmatpush1.msra.mxu0 0.0
        %1136 = vmatprep.subr.mxu0 0.0
        %1137 = vmatpush1.msra.mxu0 0.0
        %1138 = vmatprep.subr.mxu0 0.0
        %1139 = vmatpush1.msra.mxu0 0.0
        %1140 = vmatprep.subr.mxu0 0.0
        %1141 = vmatpush1.msra.mxu0 0.0
        %1142 = vmatprep.subr.mxu0 0.0
        %1143 = vmatpush1.msra.mxu0 0.0
        %1144 = vmatprep.subr.mxu0 0.0
        %1145 = vmatpush1.msra.mxu0 0.0
        %1146 = vmatprep.subr.mxu0 0.0
        %1147 = vmatpush1.msra.mxu0 0.0
        %1148 = vmatprep.subr.mxu0 0.0
        %1149 = vmatpush1.msra.mxu0 0.0
        %1150 = vmatprep.subr.mxu0 0.0
        %1151 = vmatpush1.msra.mxu0 0.0
        %1152 = vmatprep.subr.mxu0 0.0
        %1153 = vmatpush1.msra.mxu0 0.0
        %1154 = vmatprep.subr.mxu0 0.0
        %1155 = vmatpush1.msra.mxu0 0.0
        %1156 = vmatprep.subr.mxu0 0.0
        %1157 = vmatpush1.msra.mxu0 0.0
        %1158 = vmatprep.subr.mxu0 0.0
        %1159 = vmatpush1.msra.mxu0 0.0
        %1160 = vmatprep.subr.mxu0 0.0
        %1161 = vmatpush1.msra.mxu0 0.0
        %1162 = vmatprep.subr.mxu0 0.0
        %1163 = vmatpush1.msra.mxu0 0.0
        %1164 = vmatprep.subr.mxu0 0.0
        %1165 = vmatpush1.msra.mxu0 0.0
        %1166 = vmatprep.subr.mxu0 0.0
        %1167 = vmatpush1.msra.mxu0 0.0
        %1168 = vmatprep.subr.mxu0 0.0
        %1169 = vmatpush1.msra.mxu0 0.0
        %1170 = vmatprep.subr.mxu0 0.0
        %1171 = vmatpush1.msra.mxu0 0.0
        %1172 = vmatprep.subr.mxu0 0.0
        %1173 = vmatpush1.msra.mxu0 0.0
        %1174 = vmatprep.subr.mxu0 0.0
        %1175 = vmatpush1.msra.mxu0 0.0
        %1176 = vmatprep.subr.mxu0 0.0
        %1177 = vmatpush1.msra.mxu0 0.0
        %1178 = vmatprep.subr.mxu0 0.0
        %1179 = vmatpush1.msra.mxu0 0.0
        %1180 = vmatprep.mubr.f32.mxu0 0.0
        %1181 = vmatmul.mubr.f32.gmra.mrb[0].mxu0 %v1114
        %v1182 = vpop.f32.mrb[0].mxu0
        %v1183 = vadd.f32 0.0, %v1182
        %v1184 = vpop.f32.mrb[0].mxu0
        %1185 = vdwg.mxu0
        %v1187 = vsel %vm685, %v1110, 0
        %1189 = vmatprep.subr.mxu0 0.0
        %1190 = vmatpush1.msra.mxu0 %v751
        %1191 = vmatprep.subr.mxu0 0.0
        %1192 = vmatpush1.msra.mxu0 0.0
        %1193 = vmatprep.subr.mxu0 0.0
        %1194 = vmatpush1.msra.mxu0 0.0
        %1195 = vmatprep.subr.mxu0 0.0
        %1196 = vmatpush1.msra.mxu0 0.0
        %1197 = vmatprep.subr.mxu0 0.0
        %1198 = vmatpush1.msra.mxu0 0.0
        %1199 = vmatprep.subr.mxu0 0.0
        %1200 = vmatpush1.msra.mxu0 0.0
        %1201 = vmatprep.subr.mxu0 0.0
        %1202 = vmatpush1.msra.mxu0 0.0
        %1203 = vmatprep.subr.mxu0 0.0
        %1204 = vmatpush1.msra.mxu0 0.0
        %1205 = vmatprep.subr.mxu0 0.0
        %1206 = vmatpush1.msra.mxu0 0.0
        %1207 = vmatprep.subr.mxu0 0.0
        %1208 = vmatpush1.msra.mxu0 0.0
        %1209 = vmatprep.subr.mxu0 0.0
        %1210 = vmatpush1.msra.mxu0 0.0
        %1211 = vmatprep.subr.mxu0 0.0
        %1212 = vmatpush1.msra.mxu0 0.0
        %1213 = vmatprep.subr.mxu0 0.0
        %1214 = vmatpush1.msra.mxu0 0.0
        %1215 = vmatprep.subr.mxu0 0.0
        %1216 = vmatpush1.msra.mxu0 0.0
        %1217 = vmatprep.subr.mxu0 0.0
        %1218 = vmatpush1.msra.mxu0 0.0
        %1219 = vmatprep.subr.mxu0 0.0
        %1220 = vmatpush1.msra.mxu0 0.0
        %1221 = vmatprep.subr.mxu0 0.0
        %1222 = vmatpush1.msra.mxu0 0.0
        %1223 = vmatprep.subr.mxu0 0.0
        %1224 = vmatpush1.msra.mxu0 0.0
        %1225 = vmatprep.subr.mxu0 0.0
        %1226 = vmatpush1.msra.mxu0 0.0
        %1227 = vmatprep.subr.mxu0 0.0
        %1228 = vmatpush1.msra.mxu0 0.0
        %1229 = vmatprep.subr.mxu0 0.0
        %1230 = vmatpush1.msra.mxu0 0.0
        %1231 = vmatprep.subr.mxu0 0.0
        %1232 = vmatpush1.msra.mxu0 0.0
        %1233 = vmatprep.subr.mxu0 0.0
        %1234 = vmatpush1.msra.mxu0 0.0
        %1235 = vmatprep.subr.mxu0 0.0
        %1236 = vmatpush1.msra.mxu0 0.0
        %1237 = vmatprep.subr.mxu0 0.0
        %1238 = vmatpush1.msra.mxu0 0.0
        %1239 = vmatprep.subr.mxu0 0.0
        %1240 = vmatpush1.msra.mxu0 0.0
        %1241 = vmatprep.subr.mxu0 0.0
        %1242 = vmatpush1.msra.mxu0 0.0
        %1243 = vmatprep.subr.mxu0 0.0
        %1244 = vmatpush1.msra.mxu0 0.0
        %1245 = vmatprep.subr.mxu0 0.0
        %1246 = vmatpush1.msra.mxu0 0.0
        %1247 = vmatprep.subr.mxu0 0.0
        %1248 = vmatpush1.msra.mxu0 0.0
        %1249 = vmatprep.subr.mxu0 0.0
        %1250 = vmatpush1.msra.mxu0 0.0
        %1251 = vmatprep.subr.mxu0 0.0
        %1252 = vmatpush1.msra.mxu0 0.0
        %1253 = vmatprep.mubr.f32.mxu0 0.0
        %1254 = vmatmul.mubr.f32.gmra.mrb[0].mxu0 %v1187
        %v1255 = vpop.f32.mrb[0].mxu0
        %v1256 = vadd.f32 0.0, %v1255
        %v1257 = vpop.f32.mrb[0].mxu0
        %1258 = vdwg.mxu0
        %v1260 = vsel %vm685, %v1111, 0
        %1262 = vmatprep.subr.mxu0 0.0
        %1263 = vmatpush1.msra.mxu0 %v752
        %1264 = vmatprep.subr.mxu0 0.0
        %1265 = vmatpush1.msra.mxu0 0.0
        %1266 = vmatprep.subr.mxu0 0.0
        %1267 = vmatpush1.msra.mxu0 0.0
        %1268 = vmatprep.subr.mxu0 0.0
        %1269 = vmatpush1.msra.mxu0 0.0
        %1270 = vmatprep.subr.mxu0 0.0
        %1271 = vmatpush1.msra.mxu0 0.0
        %1272 = vmatprep.subr.mxu0 0.0
        %1273 = vmatpush1.msra.mxu0 0.0
        %1274 = vmatprep.subr.mxu0 0.0
        %1275 = vmatpush1.msra.mxu0 0.0
        %1276 = vmatprep.subr.mxu0 0.0
        %1277 = vmatpush1.msra.mxu0 0.0
        %1278 = vmatprep.subr.mxu0 0.0
        %1279 = vmatpush1.msra.mxu0 0.0
        %1280 = vmatprep.subr.mxu0 0.0
        %1281 = vmatpush1.msra.mxu0 0.0
        %1282 = vmatprep.subr.mxu0 0.0
        %1283 = vmatpush1.msra.mxu0 0.0
        %1284 = vmatprep.subr.mxu0 0.0
        %1285 = vmatpush1.msra.mxu0 0.0
        %1286 = vmatprep.subr.mxu0 0.0
        %1287 = vmatpush1.msra.mxu0 0.0
        %1288 = vmatprep.subr.mxu0 0.0
        %1289 = vmatpush1.msra.mxu0 0.0
        %1290 = vmatprep.subr.mxu0 0.0
        %1291 = vmatpush1.msra.mxu0 0.0
        %1292 = vmatprep.subr.mxu0 0.0
        %1293 = vmatpush1.msra.mxu0 0.0
        %1294 = vmatprep.subr.mxu0 0.0
        %1295 = vmatpush1.msra.mxu0 0.0
        %1296 = vmatprep.subr.mxu0 0.0
        %1297 = vmatpush1.msra.mxu0 0.0
        %1298 = vmatprep.subr.mxu0 0.0
        %1299 = vmatpush1.msra.mxu0 0.0
        %1300 = vmatprep.subr.mxu0 0.0
        %1301 = vmatpush1.msra.mxu0 0.0
        %1302 = vmatprep.subr.mxu0 0.0
        %1303 = vmatpush1.msra.mxu0 0.0
        %1304 = vmatprep.subr.mxu0 0.0
        %1305 = vmatpush1.msra.mxu0 0.0
        %1306 = vmatprep.subr.mxu0 0.0
        %1307 = vmatpush1.msra.mxu0 0.0
        %1308 = vmatprep.subr.mxu0 0.0
        %1309 = vmatpush1.msra.mxu0 0.0
        %1310 = vmatprep.subr.mxu0 0.0
        %1311 = vmatpush1.msra.mxu0 0.0
        %1312 = vmatprep.subr.mxu0 0.0
        %1313 = vmatpush1.msra.mxu0 0.0
        %1314 = vmatprep.subr.mxu0 0.0
        %1315 = vmatpush1.msra.mxu0 0.0
        %1316 = vmatprep.subr.mxu0 0.0
        %1317 = vmatpush1.msra.mxu0 0.0
        %1318 = vmatprep.subr.mxu0 0.0
        %1319 = vmatpush1.msra.mxu0 0.0
        %1320 = vmatprep.subr.mxu0 0.0
        %1321 = vmatpush1.msra.mxu0 0.0
        %1322 = vmatprep.subr.mxu0 0.0
        %1323 = vmatpush1.msra.mxu0 0.0
        %1324 = vmatprep.subr.mxu0 0.0
        %1325 = vmatpush1.msra.mxu0 0.0
        %1326 = vmatprep.mubr.f32.mxu0 0.0
        %1327 = vmatmul.mubr.f32.gmra.mrb[0].mxu0 %v1260
        %v1328 = vpop.f32.mrb[0].mxu0
        %v1329 = vadd.f32 0.0, %v1328
        %v1330 = vpop.f32.mrb[0].mxu0
        %1331 = vdwg.mxu0
        %v1333 = vsel %vm685, %v1112, 0
        %1335 = vmatprep.subr.mxu0 0.0
        %1336 = vmatpush1.msra.mxu0 %v753
        %1337 = vmatprep.subr.mxu0 0.0
        %1338 = vmatpush1.msra.mxu0 0.0
        %1339 = vmatprep.subr.mxu0 0.0
        %1340 = vmatpush1.msra.mxu0 0.0
        %1341 = vmatprep.subr.mxu0 0.0
        %1342 = vmatpush1.msra.mxu0 0.0
        %1343 = vmatprep.subr.mxu0 0.0
        %1344 = vmatpush1.msra.mxu0 0.0
        %1345 = vmatprep.subr.mxu0 0.0
        %1346 = vmatpush1.msra.mxu0 0.0
        %1347 = vmatprep.subr.mxu0 0.0
        %1348 = vmatpush1.msra.mxu0 0.0
        %1349 = vmatprep.subr.mxu0 0.0
        %1350 = vmatpush1.msra.mxu0 0.0
        %1351 = vmatprep.subr.mxu0 0.0
        %1352 = vmatpush1.msra.mxu0 0.0
        %1353 = vmatprep.subr.mxu0 0.0
        %1354 = vmatpush1.msra.mxu0 0.0
        %1355 = vmatprep.subr.mxu0 0.0
        %1356 = vmatpush1.msra.mxu0 0.0
        %1357 = vmatprep.subr.mxu0 0.0
        %1358 = vmatpush1.msra.mxu0 0.0
        %1359 = vmatprep.subr.mxu0 0.0
        %1360 = vmatpush1.msra.mxu0 0.0
        %1361 = vmatprep.subr.mxu0 0.0
        %1362 = vmatpush1.msra.mxu0 0.0
        %1363 = vmatprep.subr.mxu0 0.0
        %1364 = vmatpush1.msra.mxu0 0.0
        %1365 = vmatprep.subr.mxu0 0.0
        %1366 = vmatpush1.msra.mxu0 0.0
        %1367 = vmatprep.subr.mxu0 0.0
        %1368 = vmatpush1.msra.mxu0 0.0
        %1369 = vmatprep.subr.mxu0 0.0
        %1370 = vmatpush1.msra.mxu0 0.0
        %1371 = vmatprep.subr.mxu0 0.0
        %1372 = vmatpush1.msra.mxu0 0.0
        %1373 = vmatprep.subr.mxu0 0.0
        %1374 = vmatpush1.msra.mxu0 0.0
        %1375 = vmatprep.subr.mxu0 0.0
        %1376 = vmatpush1.msra.mxu0 0.0
        %1377 = vmatprep.subr.mxu0 0.0
        %1378 = vmatpush1.msra.mxu0 0.0
        %1379 = vmatprep.subr.mxu0 0.0
        %1380 = vmatpush1.msra.mxu0 0.0
        %1381 = vmatprep.subr.mxu0 0.0
        %1382 = vmatpush1.msra.mxu0 0.0
        %1383 = vmatprep.subr.mxu0 0.0
        %1384 = vmatpush1.msra.mxu0 0.0
        %1385 = vmatprep.subr.mxu0 0.0
        %1386 = vmatpush1.msra.mxu0 0.0
        %1387 = vmatprep.subr.mxu0 0.0
        %1388 = vmatpush1.msra.mxu0 0.0
        %1389 = vmatprep.subr.mxu0 0.0
        %1390 = vmatpush1.msra.mxu0 0.0
        %1391 = vmatprep.subr.mxu0 0.0
        %1392 = vmatpush1.msra.mxu0 0.0
        %1393 = vmatprep.subr.mxu0 0.0
        %1394 = vmatpush1.msra.mxu0 0.0
        %1395 = vmatprep.subr.mxu0 0.0
        %1396 = vmatpush1.msra.mxu0 0.0
        %1397 = vmatprep.subr.mxu0 0.0
        %1398 = vmatpush1.msra.mxu0 0.0
        %1399 = vmatprep.mubr.f32.mxu0 0.0
        %1400 = vmatmul.mubr.f32.gmra.mrb[0].mxu0 %v1333
        %v1401 = vpop.f32.mrb[0].mxu0
        %v1402 = vadd.f32 0.0, %v1401
        %v1403 = vpop.f32.mrb[0].mxu0
        %1404 = vdwg.mxu0
        %1405 = vst.msk [vmem:[#allocation5] sm:$0xff] %vm685, %v1183
        %1407 = vrot.lane.b32.xlu0 %v1256, 8
        %v1408 = vpop.permute.xlu0 %1407
        %vm1410 = vcmask 130112
        %1411 = vst.msk [vmem:[#allocation5] sm:$0xff] %vm1410, %v1408
        %1413 = vrot.lane.b32.xlu0 %v1329, 16
        %v1414 = vpop.permute.xlu0 %1413
        %vm1416 = vcmask 195712
        %1417 = vst.msk [vmem:[#allocation5] sm:$0xff] %vm1416, %v1414
        %1419 = vrot.lane.b32.xlu0 %v1402, 24
        %v1420 = vpop.permute.xlu0 %1419
        %vm1422 = vcmask 261312
        %1423 = vst.msk [vmem:[#allocation5] sm:$0xff] %vm1422, %v1420
        %v1424 = vld [vmem:[#allocation5] sm:$0xff]
        %v1425 = vld [vmem:[#allocation11] sm:$0xff]
        %v1426 = vld [vmem:[#allocation11 + $0x8] sm:$0xff]
        %v1427 = vld [vmem:[#allocation11 + $0x10] sm:$0xff]
        %v1428 = vld [vmem:[#allocation11 + $0x18] sm:$0xff]
        %v1429 = vld [vmem:[#allocation12] sm:$0x1]
        %v1431 = vlaneseq
        %v1432 = vshrl.u32 %v1431, 7
        %v1433 = vsub.s32 0, %v1432
        %v1434 = vrot.slane %v1429, %v1433
        %v1437 = vsel %vm578, %v1424, 0
        %1439 = vmatprep.subr.mxu0 0.0
        %1440 = vmatpush1.msra.mxu0 %v1425
        %1441 = vmatprep.subr.mxu0 0.0
        %1442 = vmatpush1.msra.mxu0 %v1426
        %1443 = vmatprep.subr.mxu0 0.0
        %1444 = vmatpush1.msra.mxu0 %v1427
        %1445 = vmatprep.subr.mxu0 0.0
        %1446 = vmatpush1.msra.mxu0 %v1428
        %1447 = vmatprep.subr.mxu0 0.0
        %1448 = vmatpush1.msra.mxu0 0.0
        %1449 = vmatprep.subr.mxu0 0.0
        %1450 = vmatpush1.msra.mxu0 0.0
        %1451 = vmatprep.subr.mxu0 0.0
        %1452 = vmatpush1.msra.mxu0 0.0
        %1453 = vmatprep.subr.mxu0 0.0
        %1454 = vmatpush1.msra.mxu0 0.0
        %1455 = vmatprep.subr.mxu0 0.0
        %1456 = vmatpush1.msra.mxu0 0.0
        %1457 = vmatprep.subr.mxu0 0.0
        %1458 = vmatpush1.msra.mxu0 0.0
        %1459 = vmatprep.subr.mxu0 0.0
        %1460 = vmatpush1.msra.mxu0 0.0
        %1461 = vmatprep.subr.mxu0 0.0
        %1462 = vmatpush1.msra.mxu0 0.0
        %1463 = vmatprep.subr.mxu0 0.0
        %1464 = vmatpush1.msra.mxu0 0.0
        %1465 = vmatprep.subr.mxu0 0.0
        %1466 = vmatpush1.msra.mxu0 0.0
        %1467 = vmatprep.subr.mxu0 0.0
        %1468 = vmatpush1.msra.mxu0 0.0
        %1469 = vmatprep.subr.mxu0 0.0
        %1470 = vmatpush1.msra.mxu0 0.0
        %1471 = vmatprep.subr.mxu0 0.0
        %1472 = vmatpush1.msra.mxu0 0.0
        %1473 = vmatprep.subr.mxu0 0.0
        %1474 = vmatpush1.msra.mxu0 0.0
        %1475 = vmatprep.subr.mxu0 0.0
        %1476 = vmatpush1.msra.mxu0 0.0
        %1477 = vmatprep.subr.mxu0 0.0
        %1478 = vmatpush1.msra.mxu0 0.0
        %1479 = vmatprep.subr.mxu0 0.0
        %1480 = vmatpush1.msra.mxu0 0.0
        %1481 = vmatprep.subr.mxu0 0.0
        %1482 = vmatpush1.msra.mxu0 0.0
        %1483 = vmatprep.subr.mxu0 0.0
        %1484 = vmatpush1.msra.mxu0 0.0
        %1485 = vmatprep.subr.mxu0 0.0
        %1486 = vmatpush1.msra.mxu0 0.0
        %1487 = vmatprep.subr.mxu0 0.0
        %1488 = vmatpush1.msra.mxu0 0.0
        %1489 = vmatprep.subr.mxu0 0.0
        %1490 = vmatpush1.msra.mxu0 0.0
        %1491 = vmatprep.subr.mxu0 0.0
        %1492 = vmatpush1.msra.mxu0 0.0
        %1493 = vmatprep.subr.mxu0 0.0
        %1494 = vmatpush1.msra.mxu0 0.0
        %1495 = vmatprep.subr.mxu0 0.0
        %1496 = vmatpush1.msra.mxu0 0.0
        %1497 = vmatprep.subr.mxu0 0.0
        %1498 = vmatpush1.msra.mxu0 0.0
        %1499 = vmatprep.subr.mxu0 0.0
        %1500 = vmatpush1.msra.mxu0 0.0
        %1501 = vmatprep.subr.mxu0 0.0
        %1502 = vmatpush1.msra.mxu0 0.0
        %1503 = vmatprep.mubr.f32.mxu0 0.0
        %1504 = vmatmul.mubr.f32.gmra.mrb[0].mxu0 %v1437
        %v1505 = vpop.f32.mrb[0].mxu0
        %v1506 = vadd.f32 %v1434, %v1505
        %v1507 = vpop.f32.mrb[0].mxu0
        %1508 = vdwg.mxu0
        %v1509 = vadd.f32 %v575, %v1506
        %v1510 = vld [vmem:[#allocation23] sm:$0x1]
        %v1511 = vld [vmem:[#allocation24] sm:$0x1]
        %v1512 = vsel %vm578, %v1509, 0.0
        %1513 = vadd.xlane.f32.xlu0 %v1512
        %v1514 = vpop.xlane.xlu0 %1513
        %v1515 = vmul.f32 %v1514, %v582
        %v1516 = vsub.f32 %v1509, %v1515
        %v1517 = vmul.f32 %v1516, %v1516
        %v1518 = vsel %vm578, %v1517, 0.0
        %1519 = vadd.xlane.f32.xlu0 %v1518
        %v1520 = vpop.xlane.xlu0 %1519
        %v1521 = vmul.f32 %v1520, %v582
        %v1522 = vadd.f32 %v1521, 1e-05
        %v1523 = vrsqrt.pop %v1522
        %v1524 = vmul.f32 %v1516, %v1523
        %v1526 = vlaneseq
        %v1527 = vshrl.u32 %v1526, 7
        %v1528 = vsub.s32 0, %v1527
        %v1529 = vrot.slane %v1510, %v1528
        %v1531 = vmul.f32 %v1524, %v1529
        %v1533 = vlaneseq
        %v1534 = vshrl.u32 %v1533, 7
        %v1535 = vsub.s32 0, %v1534
        %v1536 = vrot.slane %v1511, %v1535
        %v1538 = vadd.f32 %v1531, %v1536
        %v1539 = vld [vmem:[#allocation14] sm:$0xff]
        %v1540 = vld [vmem:[#allocation14 + $0x8] sm:$0xff]
        %v1541 = vld [vmem:[#allocation14 + $0x10] sm:$0xff]
        %v1542 = vld [vmem:[#allocation14 + $0x18] sm:$0xff]
        %v1543 = vld [vmem:[#allocation15] sm:$0x1]
        %v1545 = vlaneseq
        %v1546 = vshrl.u32 %v1545, 7
        %v1547 = vsub.s32 0, %v1546
        %v1548 = vrot.slane %v1543, %v1547
        %v1551 = vsel %vm578, %v1538, 0
        %1553 = vmatprep.subr.mxu0 0.0
        %1554 = vmatpush1.msra.mxu0 %v1539
        %1555 = vmatprep.subr.mxu0 0.0
        %1556 = vmatpush1.msra.mxu0 %v1540
        %1557 = vmatprep.subr.mxu0 0.0
        %1558 = vmatpush1.msra.mxu0 %v1541
        %1559 = vmatprep.subr.mxu0 0.0
        %1560 = vmatpush1.msra.mxu0 %v1542
        %1561 = vmatprep.subr.mxu0 0.0
        %1562 = vmatpush1.msra.mxu0 0.0
        %1563 = vmatprep.subr.mxu0 0.0
        %1564 = vmatpush1.msra.mxu0 0.0
        %1565 = vmatprep.subr.mxu0 0.0
        %1566 = vmatpush1.msra.mxu0 0.0
        %1567 = vmatprep.subr.mxu0 0.0
        %1568 = vmatpush1.msra.mxu0 0.0
        %1569 = vmatprep.subr.mxu0 0.0
        %1570 = vmatpush1.msra.mxu0 0.0
        %1571 = vmatprep.subr.mxu0 0.0
        %1572 = vmatpush1.msra.mxu0 0.0
        %1573 = vmatprep.subr.mxu0 0.0
        %1574 = vmatpush1.msra.mxu0 0.0
        %1575 = vmatprep.subr.mxu0 0.0
        %1576 = vmatpush1.msra.mxu0 0.0
        %1577 = vmatprep.subr.mxu0 0.0
        %1578 = vmatpush1.msra.mxu0 0.0
        %1579 = vmatprep.subr.mxu0 0.0
        %1580 = vmatpush1.msra.mxu0 0.0
        %1581 = vmatprep.subr.mxu0 0.0
        %1582 = vmatpush1.msra.mxu0 0.0
        %1583 = vmatprep.subr.mxu0 0.0
        %1584 = vmatpush1.msra.mxu0 0.0
        %1585 = vmatprep.subr.mxu0 0.0
        %1586 = vmatpush1.msra.mxu0 0.0
        %1587 = vmatprep.subr.mxu0 0.0
        %1588 = vmatpush1.msra.mxu0 0.0
        %1589 = vmatprep.subr.mxu0 0.0
        %1590 = vmatpush1.msra.mxu0 0.0
        %1591 = vmatprep.subr.mxu0 0.0
        %1592 = vmatpush1.msra.mxu0 0.0
        %1593 = vmatprep.subr.mxu0 0.0
        %1594 = vmatpush1.msra.mxu0 0.0
        %1595 = vmatprep.subr.mxu0 0.0
        %1596 = vmatpush1.msra.mxu0 0.0
        %1597 = vmatprep.subr.mxu0 0.0
        %1598 = vmatpush1.msra.mxu0 0.0
        %1599 = vmatprep.subr.mxu0 0.0
        %1600 = vmatpush1.msra.mxu0 0.0
        %1601 = vmatprep.subr.mxu0 0.0
        %1602 = vmatpush1.msra.mxu0 0.0
        %1603 = vmatprep.subr.mxu0 0.0
        %1604 = vmatpush1.msra.mxu0 0.0
        %1605 = vmatprep.subr.mxu0 0.0
        %1606 = vmatpush1.msra.mxu0 0.0
        %1607 = vmatprep.subr.mxu0 0.0
        %1608 = vmatpush1.msra.mxu0 0.0
        %1609 = vmatprep.subr.mxu0 0.0
        %1610 = vmatpush1.msra.mxu0 0.0
        %1611 = vmatprep.subr.mxu0 0.0
        %1612 = vmatpush1.msra.mxu0 0.0
        %1613 = vmatprep.subr.mxu0 0.0
        %1614 = vmatpush1.msra.mxu0 0.0
        %1615 = vmatprep.subr.mxu0 0.0
        %1616 = vmatpush1.msra.mxu0 0.0
        %1617 = vmatprep.mubr.f32.mxu0 0.0
        %1618 = vmatmul.mubr.f32.gmra.mrb[0].mxu0 %v1551
        %v1619 = vpop.f32.mrb[0].mxu0
        %v1620 = vadd.f32 %v1548, %v1619
        %v1621 = vpop.f32.mrb[0].mxu0
        %1622 = vdwg.mxu0
        %v1623 = vmax.f32 %v1620, 0.0
        %v1624 = vld [vmem:[#allocation17] sm:$0xff]
        %v1625 = vld [vmem:[#allocation17 + $0x8] sm:$0xff]
        %v1626 = vld [vmem:[#allocation17 + $0x10] sm:$0xff]
        %v1627 = vld [vmem:[#allocation17 + $0x18] sm:$0xff]
        %v1628 = vld [vmem:[#allocation17 + $0x20] sm:$0xff]
        %v1629 = vld [vmem:[#allocation17 + $0x28] sm:$0xff]
        %v1630 = vld [vmem:[#allocation17 + $0x30] sm:$0xff]
        %v1631 = vld [vmem:[#allocation17 + $0x38] sm:$0xff]
        %v1632 = vld [vmem:[#allocation17 + $0x40] sm:$0xff]
        %v1633 = vld [vmem:[#allocation17 + $0x48] sm:$0xff]
        %v1634 = vld [vmem:[#allocation17 + $0x50] sm:$0xff]
        %v1635 = vld [vmem:[#allocation17 + $0x58] sm:$0xff]
        %v1636 = vld [vmem:[#allocation17 + $0x60] sm:$0xff]
        %v1637 = vld [vmem:[#allocation17 + $0x68] sm:$0xff]
        %v1638 = vld [vmem:[#allocation17 + $0x70] sm:$0xff]
        %v1639 = vld [vmem:[#allocation17 + $0x78] sm:$0xff]
        %1640 = vmatprep.subr.mxu0 0.0
        %1641 = vmatpush1.msra.mxu0 %v1624
        %1642 = vmatprep.subr.mxu0 0.0
        %1643 = vmatpush1.msra.mxu0 %v1625
        %1644 = vmatprep.subr.mxu0 0.0
        %1645 = vmatpush1.msra.mxu0 %v1626
        %1646 = vmatprep.subr.mxu0 0.0
        %1647 = vmatpush1.msra.mxu0 %v1627
        %1648 = vmatprep.subr.mxu0 0.0
        %1649 = vmatpush1.msra.mxu0 %v1628
        %1650 = vmatprep.subr.mxu0 0.0
        %1651 = vmatpush1.msra.mxu0 %v1629
        %1652 = vmatprep.subr.mxu0 0.0
        %1653 = vmatpush1.msra.mxu0 %v1630
        %1654 = vmatprep.subr.mxu0 0.0
        %1655 = vmatpush1.msra.mxu0 %v1631
        %1656 = vmatprep.subr.mxu0 0.0
        %1657 = vmatpush1.msra.mxu0 %v1632
        %1658 = vmatprep.subr.mxu0 0.0
        %1659 = vmatpush1.msra.mxu0 %v1633
        %1660 = vmatprep.subr.mxu0 0.0
        %1661 = vmatpush1.msra.mxu0 %v1634
        %1662 = vmatprep.subr.mxu0 0.0
        %1663 = vmatpush1.msra.mxu0 %v1635
        %1664 = vmatprep.subr.mxu0 0.0
        %1665 = vmatpush1.msra.mxu0 %v1636
        %1666 = vmatprep.subr.mxu0 0.0
        %1667 = vmatpush1.msra.mxu0 %v1637
        %1668 = vmatprep.subr.mxu0 0.0
        %1669 = vmatpush1.msra.mxu0 %v1638
        %1670 = vmatprep.subr.mxu0 0.0
        %1671 = vmatpush1.msra.mxu0 %v1639
        %1672 = vmatprep.subr.mxu0 0.0
        %1673 = vmatpush1.msra.mxu0 0.0
        %1674 = vmatprep.subr.mxu0 0.0
        %1675 = vmatpush1.msra.mxu0 0.0
        %1676 = vmatprep.subr.mxu0 0.0
        %1677 = vmatpush1.msra.mxu0 0.0
        %1678 = vmatprep.subr.mxu0 0.0
        %1679 = vmatpush1.msra.mxu0 0.0
        %1680 = vmatprep.subr.mxu0 0.0
        %1681 = vmatpush1.msra.mxu0 0.0
        %1682 = vmatprep.subr.mxu0 0.0
        %1683 = vmatpush1.msra.mxu0 0.0
        %1684 = vmatprep.subr.mxu0 0.0
        %1685 = vmatpush1.msra.mxu0 0.0
        %1686 = vmatprep.subr.mxu0 0.0
        %1687 = vmatpush1.msra.mxu0 0.0
        %1688 = vmatprep.subr.mxu0 0.0
        %1689 = vmatpush1.msra.mxu0 0.0
        %1690 = vmatprep.subr.mxu0 0.0
        %1691 = vmatpush1.msra.mxu0 0.0
        %1692 = vmatprep.subr.mxu0 0.0
        %1693 = vmatpush1.msra.mxu0 0.0
        %1694 = vmatprep.subr.mxu0 0.0
        %1695 = vmatpush1.msra.mxu0 0.0
        %1696 = vmatprep.subr.mxu0 0.0
        %1697 = vmatpush1.msra.mxu0 0.0
        %1698 = vmatprep.subr.mxu0 0.0
        %1699 = vmatpush1.msra.mxu0 0.0
        %1700 = vmatprep.subr.mxu0 0.0
        %1701 = vmatpush1.msra.mxu0 0.0
        %1702 = vmatprep.subr.mxu0 0.0
        %1703 = vmatpush1.msra.mxu0 0.0
        %1704 = vmatprep.mubr.f32.mxu0 0.0
        %1705 = vmatmul.mubr.f32.gmra.mrb[0].mxu0 %v1623
        %v1706 = vpop.f32.mrb[0].mxu0
        %v1707 = vadd.f32 0.0, %v1706
        %v1708 = vpop.f32.mrb[0].mxu0
        %1709 = vdwg.mxu0
        %v1710 = vadd.f32 %v1509, %v1707
        %v1711 = vld [vmem:[#allocation18] sm:$0x1]
        %v1713 = vlaneseq
        %v1714 = vshrl.u32 %v1713, 7
        %v1715 = vsub.s32 0, %v1714
        %v1716 = vrot.slane %v1711, %v1715
        %v1718 = vadd.f32 %v1710, %v1716
        %1719 = vst.msk [vmem:[%s574] sm:$0xff] %vm578, %v1718
        %s1720 = sand.u32 %s300, 1
        %s1721 = scalar_lea.sflag [#allocation8], %s1720
        %s1722 = sand.u32 %s300, 1
        %s1723 = smul.addr %s1722, 8
        %s1724 = scalar_lea.vmem [#allocation26], %s1723
        // Predicated region
        $region117: #{tpu_custom_call.1} parent=67 // pred_check
          %p1725 = pneg %p310
        $region118: #{tpu_custom_call.1} parent=67 // pred_check_branch
          %1727 = sbr.rel (%p1725) target = $region120
        $region119: #{tpu_custom_call.1} parent=67 // pred_region
          %s1729 = ssub.s32 128, 128
          %1730 = vsyncadd %s1721, %s1729
          %s1731 = smul.addr %s35, 128
          %s1732 = scalar_lea.hbm %s12, %s1731
          %s1734 = sshll.u32 %s1724, 4
          %s1735 = int_to_ptr.vmem [resolvable:$true] %s1734
          %1737 = dma.vmem_to_hbm [thread:$0]  %s1735, 128, %s1732, %s1721
        $region120: #{tpu_custom_call.1} parent=67 // pred_fallthru
          _
      $region68: #{tpu_custom_call.1} parent=5 // pred_fallthru
        _
      %p1738 = scmp.le.s32.totalorder 2, %s30
      // Predicated region
      $region121: #{tpu_custom_call.1} parent=5 // pred_check
        %p1739 = pneg %p1738
      $region122: #{tpu_custom_call.1} parent=5 // pred_check_branch
        %1741 = sbr.rel (%p1739) target = $region124
      $region123: #{tpu_custom_call.1} parent=5 // pred_region
        %s1742 = ssub.s32 %s30, 2
        // Predicated region
        $region125: #{tpu_custom_call.1} parent=123 // pred_check
          %p1743 = pneg %p316
        $region126: #{tpu_custom_call.1} parent=123 // pred_check_branch
          %1745 = sbr.rel (%p1743) target = $region128
        $region127: #{tpu_custom_call.1} parent=123 // pred_region
          %s1746 = sand.u32 %s301, 1
          %s1747 = scalar_lea.sflag [#allocation8], %s1746
          %s1748 = sand.u32 %s301, 1
          %s1749 = smul.addr %s1748, 8
          %s1750 = scalar_lea.vmem [#allocation26], %s1749
          %1751 = dma.done %s1747, 128
        $region128: #{tpu_custom_call.1} parent=123 // pred_fallthru
          _
      $region124: #{tpu_custom_call.1} parent=5 // pred_fallthru
        _
    $region6: #{tpu_custom_call.1} parent=1 // loop_footer
      %s34 = sadd.s32 1, %s30
    $region7: #{tpu_custom_call.1} parent=1 // loop_footer_branch
      %29 = sbr.rel target = $region3
    $region8: #{tpu_custom_call.1} parent=1 // loop_exit
      _
    %1752 = vsyncpa [#allocation7], 1
    %s1753 = scalar_lea.sflag [#allocation7], 1
    %1754 = vsyncpa %s1753, 1
    %1755 = vsyncpa [#allocation10], 1
    %1756 = vsyncpa [#allocation13], 1
    %1757 = vsyncpa [#allocation16], 1
    %1758 = vsyncpa [#allocation19], 1
    %1759 = vsyncpa [#allocation22], 1
    %1760 = vsyncpa [#allocation25], 1
    %1761 = vsyncpa [#allocation8], 1
    %s1762 = scalar_lea.sflag [#allocation8], 1
    %1763 = vsyncpa %s1762, 1

</llo_original>
